<compile_context>
chip_gen: v7x
topology: tpu7x:2x2x1
jax: 0.10.0
libtpu: 0.0.40
codegen_flags: <defaults>
</compile_context>

<pallas_src>
import functools

import jax
import jax.numpy as jnp
from jax.experimental import pallas as pl
from jax.experimental.pallas import tpu as pltpu


# ---------------------------------------------------------------------------
# Fused kernel: LayerNorm + QKV + attention + output projection
# ---------------------------------------------------------------------------
def fused_attention_kernel(x_ref, gamma_ref, beta_ref, wqkv_ref, wout_ref,
                           out_ref, *, block_b, heads, dh, scale, eps):
    # x_ref:     (block_b, N, D)
    # gamma/beta:(1, D)
    # wqkv_ref:  (D, 3*inner)
    # wout_ref:  (inner, D)
    # out_ref:   (block_b, N, D)
    _, N, D = x_ref.shape
    inner = heads * dh
    tokens = block_b * N
    mxu_dtype = wqkv_ref.dtype            # bf16-friendly MXU operand dtype

    # ---- LayerNorm over all tokens in the block (f32 math, biased var) -----
    x = x_ref[...].reshape(tokens, D).astype(jnp.float32)
    mean = jnp.mean(x, axis=-1, keepdims=True)
    var = jnp.mean((x - mean) ** 2, axis=-1, keepdims=True)
    xn = (x - mean) * jax.lax.rsqrt(var + eps)
    xn = xn * gamma_ref[...].astype(jnp.float32) + beta_ref[...].astype(jnp.float32)

    # ---- Fused QKV projection on the whole token slab (tall MXU matmul) ----
    qkv = jnp.dot(xn.astype(mxu_dtype), wqkv_ref[...],
                  preferred_element_type=jnp.float32)          # (tokens, 3*inner)

    # ---- Per-head attention + accumulated output projection ----------------
    acc = jnp.zeros((tokens, D), jnp.float32)
    for h in range(heads):                                     # unrolled (static)
        q0, k0, v0 = h * dh, inner + h * dh, 2 * inner + h * dh
        o_parts = []
        for b in range(block_b):                               # unrolled (static)
            tok = qkv[b * N:(b + 1) * N, :]                    # (N, 3*inner)
            q = tok[:, q0:q0 + dh] * scale                     # (N, dh)
            k = tok[:, k0:k0 + dh]                             # (N, dh)
            v = tok[:, v0:v0 + dh]                             # (N, dh)

            s = jnp.dot(q.astype(mxu_dtype), k.astype(mxu_dtype).T,
                        preferred_element_type=jnp.float32)    # (N, N)
            s = s - jnp.max(s, axis=-1, keepdims=True)
            p = jnp.exp(s)
            p = p * pl.reciprocal(jnp.sum(p, axis=-1, keepdims=True), approx=True)

            o_parts.append(jnp.dot(p.astype(mxu_dtype), v.astype(mxu_dtype),
                                   preferred_element_type=jnp.float32))  # (N, dh)

        o_all = o_parts[0] if block_b == 1 else jnp.concatenate(o_parts, axis=0)
        # acc += o_all @ W_out[h*dh:(h+1)*dh, :]   (no head concat needed)
        acc = acc + jnp.dot(o_all.astype(mxu_dtype),
                            wout_ref[h * dh:(h + 1) * dh, :],
                            preferred_element_type=jnp.float32)          # (tokens, D)

    out_ref[...] = acc.reshape(block_b, N, D).astype(out_ref.dtype)


# ---------------------------------------------------------------------------
# Wrapper
# ---------------------------------------------------------------------------
def _pick_block_b(B, N):
    """Largest divisor of B such that tokens-per-step stays modest (VMEM)."""
    max_tokens = 1024
    bb = max(1, min(B, max_tokens // max(N, 1)))
    while B % bb != 0:
        bb -= 1
    return bb


def attention_forward(x, gamma, beta, w_qkv, w_out, *, heads, eps=1e-5):
    B, N, D = x.shape
    inner3 = w_qkv.shape[1]
    inner = inner3 // 3
    dh = inner // heads
    scale = float(dh) ** (-0.5)
    block_b = _pick_block_b(B, N)

    kernel = functools.partial(fused_attention_kernel, block_b=block_b,
                               heads=heads, dh=dh, scale=scale, eps=eps)

    return pl.pallas_call(
        kernel,
        out_shape=jax.ShapeDtypeStruct((B, N, D), x.dtype),
        grid_spec=pltpu.PrefetchScalarGridSpec(
            num_scalar_prefetch=0,
            grid=(B // block_b,),
            in_specs=[
                pl.BlockSpec((block_b, N, D), lambda i: (i, 0, 0)),  # x
                pl.BlockSpec((1, D), lambda i: (0, 0)),              # gamma (resident)
                pl.BlockSpec((1, D), lambda i: (0, 0)),              # beta  (resident)
                pl.BlockSpec((D, inner3), lambda i: (0, 0)),         # W_qkv (resident)
                pl.BlockSpec((inner, D), lambda i: (0, 0)),          # W_out (resident)
            ],
            out_specs=pl.BlockSpec((block_b, N, D), lambda i: (i, 0, 0)),
        ),
        compiler_params=pltpu.CompilerParams(
            dimension_semantics=("parallel",)),
    )(x, gamma, beta, w_qkv, w_out)


# ---------------------------------------------------------------------------
# Pure-JAX reference (mirrors the PyTorch forward) for sanity checking
# ---------------------------------------------------------------------------
def attention_reference(x, gamma, beta, w_qkv, w_out, *, heads, eps=1e-5):
    B, N, D = x.shape
    inner = w_qkv.shape[1] // 3
    dh = inner // heads
    mean = jnp.mean(x, axis=-1, keepdims=True)
    var = jnp.mean((x - mean) ** 2, axis=-1, keepdims=True)
    xn = (x - mean) / jnp.sqrt(var + eps) * gamma[0] + beta[0]
    qkv = xn @ w_qkv
    q, k, v = jnp.split(qkv, 3, axis=-1)
    to_heads = lambda t: t.reshape(B, N, heads, dh).transpose(0, 2, 1, 3)
    q, k, v = map(to_heads, (q, k, v))
    s = jnp.einsum("bhnd,bhmd->bhnm", q, k) * (dh ** -0.5)
    p = jax.nn.softmax(s, axis=-1)
    o = jnp.einsum("bhnm,bhmd->bhnd", p, v)
    o = o.transpose(0, 2, 1, 3).reshape(B, N, inner)
    return o @ w_out


# ---------------------------------------------------------------------------
if __name__ == "__main__":
    # Small shapes consistent with the module: dim=32, heads=4, dim_head=16
    B, N, D = 2, 8, 32
    HEADS, DIM_HEAD = 4, 16
    INNER = HEADS * DIM_HEAD

    key = jax.random.PRNGKey(0)
    kx, kqkv, kout = jax.random.split(key, 3)

    x = jax.random.normal(kx, (B, N, D), dtype=jnp.float32)

    # PyTorch LayerNorm default init: gamma=1, beta=0 (contract: shape (1, D))
    gamma = jnp.ones((1, D), dtype=jnp.float32)
    beta = jnp.zeros((1, D), dtype=jnp.float32)
    # Linear weights stored already transposed: y = x @ W  (W = torch_weight.T)
    w_qkv = 0.02 * jax.random.normal(kqkv, (D, 3 * INNER), dtype=jnp.float32)
    w_out = 0.02 * jax.random.normal(kout, (INNER, D), dtype=jnp.float32)

    out = attention_forward(x, gamma, beta, w_qkv, w_out, heads=HEADS)
    out = jax.block_until_ready(out)

    ref = attention_reference(x, gamma, beta, w_qkv, w_out, heads=HEADS)
    assert out.shape == (B, N, D)
    # approx reciprocal in the softmax denominator -> slightly looser tolerance
    assert jnp.allclose(out, ref, atol=2e-3, rtol=2e-3), "mismatch vs reference"

    print("KERNEL_OK")
</pallas_src>

<mosaic_0001>
module attributes {stable_mosaic.version = 11 : i64} {
  func.func @fused_attention_kernel(%arg0: i32, %arg1: memref<2x8x32xf32, #tpu.memory_space<vmem>>, %arg2: memref<1x32xf32, #tpu.memory_space<vmem>>, %arg3: memref<1x32xf32, #tpu.memory_space<vmem>>, %arg4: memref<32x192xf32, #tpu.memory_space<vmem>>, %arg5: memref<64x32xf32, #tpu.memory_space<vmem>>, %arg6: memref<2x8x32xf32, #tpu.memory_space<vmem>>) attributes {dimension_semantics = [#tpu.dimension_semantics<parallel>], iteration_bounds = array<i64: 1>, scalar_prefetch = 0 : i64, scratch_operands = 0 : i64, tpu.core_type = #tpu.core_type<tc>, window_params = [{transform_indices = @transform_0, window_bounds = array<i64: 2, 8, 32>}, {pipeline_mode = #tpu.pipeline_mode<synchronous>, transform_indices = @transform_1, window_bounds = array<i64: 1, 32>}, {pipeline_mode = #tpu.pipeline_mode<synchronous>, transform_indices = @transform_2, window_bounds = array<i64: 1, 32>}, {pipeline_mode = #tpu.pipeline_mode<synchronous>, transform_indices = @transform_3, window_bounds = array<i64: 32, 192>}, {pipeline_mode = #tpu.pipeline_mode<synchronous>, transform_indices = @transform_4, window_bounds = array<i64: 64, 32>}, {transform_indices = @transform_5, window_bounds = array<i64: 2, 8, 32>}]} {
    %c0 = arith.constant 0 : index
    %c0_0 = arith.constant 0 : index
    %c0_1 = arith.constant 0 : index
    %0 = vector.load %arg1[%c0, %c0_0, %c0_1] : memref<2x8x32xf32, #tpu.memory_space<vmem>>, vector<2x8x32xf32>
    %1 = vector.shape_cast %0 : vector<2x8x32xf32> to vector<16x32xf32>
    %cst = arith.constant dense<0.000000e+00> : vector<16xf32>
    %2 = vector.multi_reduction <add>, %1, %cst [1] : vector<16x32xf32> to vector<16xf32>
    %3 = vector.shape_cast %2 : vector<16xf32> to vector<16x1xf32>
    %cst_2 = arith.constant 3.200000e+01 : f32
    %4 = vector.broadcast %cst_2 : f32 to vector<16x1xf32>
    %5 = arith.divf %3, %4 : vector<16x1xf32>
    %6 = vector.broadcast %5 : vector<16x1xf32> to vector<16x32xf32>
    %7 = arith.subf %1, %6 : vector<16x32xf32>
    %8 = arith.mulf %7, %7 : vector<16x32xf32>
    %cst_3 = arith.constant dense<0.000000e+00> : vector<16xf32>
    %9 = vector.multi_reduction <add>, %8, %cst_3 [1] : vector<16x32xf32> to vector<16xf32>
    %10 = vector.shape_cast %9 : vector<16xf32> to vector<16x1xf32>
    %cst_4 = arith.constant 3.200000e+01 : f32
    %11 = vector.broadcast %cst_4 : f32 to vector<16x1xf32>
    %12 = arith.divf %10, %11 : vector<16x1xf32>
    %13 = vector.broadcast %5 : vector<16x1xf32> to vector<16x32xf32>
    %14 = arith.subf %1, %13 : vector<16x32xf32>
    %cst_5 = arith.constant 9.99999974E-6 : f32
    %15 = vector.broadcast %cst_5 : f32 to vector<16x1xf32>
    %16 = arith.addf %12, %15 : vector<16x1xf32>
    %17 = math.rsqrt %16 : vector<16x1xf32>
    %18 = vector.broadcast %17 : vector<16x1xf32> to vector<16x32xf32>
    %19 = arith.mulf %14, %18 : vector<16x32xf32>
    %c0_6 = arith.constant 0 : index
    %c0_7 = arith.constant 0 : index
    %20 = vector.load %arg2[%c0_6, %c0_7] : memref<1x32xf32, #tpu.memory_space<vmem>>, vector<1x32xf32>
    %21 = vector.broadcast %20 : vector<1x32xf32> to vector<16x32xf32>
    %22 = arith.mulf %19, %21 : vector<16x32xf32>
    %c0_8 = arith.constant 0 : index
    %c0_9 = arith.constant 0 : index
    %23 = vector.load %arg3[%c0_8, %c0_9] : memref<1x32xf32, #tpu.memory_space<vmem>>, vector<1x32xf32>
    %24 = vector.broadcast %23 : vector<1x32xf32> to vector<16x32xf32>
    %25 = arith.addf %22, %24 : vector<16x32xf32>
    %c0_10 = arith.constant 0 : index
    %c0_11 = arith.constant 0 : index
    %26 = vector.load %arg4[%c0_10, %c0_11] : memref<32x192xf32, #tpu.memory_space<vmem>>, vector<32x192xf32>
    %cst_12 = arith.constant dense<0.000000e+00> : vector<16x192xf32>
    %27 = tpu.matmul %25, %26, %cst_12 {dimension_numbers = #tpu.dot_dimension_numbers<[1], [0], [0], [1], [0, 0, 1, 1], [], []>} : vector<16x32xf32>, vector<32x192xf32>, vector<16x192xf32> -> vector<16x192xf32>
    %cst_13 = arith.constant 0.000000e+00 : f32
    %28 = vector.broadcast %cst_13 : f32 to vector<16x32xf32>
    %29 = vector.extract_strided_slice %27 {offsets = [0, 0], sizes = [8, 192], strides = [1, 1]} : vector<16x192xf32> to vector<8x192xf32>
    %30 = vector.extract_strided_slice %29 {offsets = [0, 0], sizes = [8, 16], strides = [1, 1]} : vector<8x192xf32> to vector<8x16xf32>
    %cst_14 = arith.constant 2.500000e-01 : f32
    %31 = vector.broadcast %cst_14 : f32 to vector<8x16xf32>
    %32 = arith.mulf %30, %31 : vector<8x16xf32>
    %33 = vector.extract_strided_slice %29 {offsets = [0, 64], sizes = [8, 16], strides = [1, 1]} : vector<8x192xf32> to vector<8x16xf32>
    %34 = vector.extract_strided_slice %29 {offsets = [0, 128], sizes = [8, 16], strides = [1, 1]} : vector<8x192xf32> to vector<8x16xf32>
    %35 = tpu.transpose %33, [1, 0] : vector<8x16xf32> -> vector<16x8xf32>
    %cst_15 = arith.constant dense<0.000000e+00> : vector<8x8xf32>
    %36 = tpu.matmul %32, %35, %cst_15 {dimension_numbers = #tpu.dot_dimension_numbers<[1], [0], [0], [1], [0, 0, 1, 1], [], []>} : vector<8x16xf32>, vector<16x8xf32>, vector<8x8xf32> -> vector<8x8xf32>
    %cst_16 = arith.constant dense<0xFF800000> : vector<8xf32>
    %37 = vector.multi_reduction <maximumf>, %36, %cst_16 [1] : vector<8x8xf32> to vector<8xf32>
    %38 = vector.shape_cast %37 : vector<8xf32> to vector<8x1xf32>
    %39 = vector.broadcast %38 : vector<8x1xf32> to vector<8x8xf32>
    %40 = arith.subf %36, %39 : vector<8x8xf32>
    %41 = math.exp %40 : vector<8x8xf32>
    %cst_17 = arith.constant dense<0.000000e+00> : vector<8xf32>
    %42 = vector.multi_reduction <add>, %41, %cst_17 [1] : vector<8x8xf32> to vector<8xf32>
    %43 = vector.shape_cast %42 : vector<8xf32> to vector<8x1xf32>
    %44 = tpu.reciprocal %43 {approx = true} : vector<8x1xf32> -> vector<8x1xf32>
    %45 = vector.broadcast %44 : vector<8x1xf32> to vector<8x8xf32>
    %46 = arith.mulf %41, %45 : vector<8x8xf32>
    %cst_18 = arith.constant dense<0.000000e+00> : vector<8x16xf32>
    %47 = tpu.matmul %46, %34, %cst_18 {dimension_numbers = #tpu.dot_dimension_numbers<[1], [0], [0], [1], [0, 0, 1, 1], [], []>} : vector<8x8xf32>, vector<8x16xf32>, vector<8x16xf32> -> vector<8x16xf32>
    %48 = vector.extract_strided_slice %27 {offsets = [8, 0], sizes = [8, 192], strides = [1, 1]} : vector<16x192xf32> to vector<8x192xf32>
    %49 = vector.extract_strided_slice %48 {offsets = [0, 0], sizes = [8, 16], strides = [1, 1]} : vector<8x192xf32> to vector<8x16xf32>
    %cst_19 = arith.constant 2.500000e-01 : f32
    %50 = vector.broadcast %cst_19 : f32 to vector<8x16xf32>
    %51 = arith.mulf %49, %50 : vector<8x16xf32>
    %52 = vector.extract_strided_slice %48 {offsets = [0, 64], sizes = [8, 16], strides = [1, 1]} : vector<8x192xf32> to vector<8x16xf32>
    %53 = vector.extract_strided_slice %48 {offsets = [0, 128], sizes = [8, 16], strides = [1, 1]} : vector<8x192xf32> to vector<8x16xf32>
    %54 = tpu.transpose %52, [1, 0] : vector<8x16xf32> -> vector<16x8xf32>
    %cst_20 = arith.constant dense<0.000000e+00> : vector<8x8xf32>
    %55 = tpu.matmul %51, %54, %cst_20 {dimension_numbers = #tpu.dot_dimension_numbers<[1], [0], [0], [1], [0, 0, 1, 1], [], []>} : vector<8x16xf32>, vector<16x8xf32>, vector<8x8xf32> -> vector<8x8xf32>
    %cst_21 = arith.constant dense<0xFF800000> : vector<8xf32>
    %56 = vector.multi_reduction <maximumf>, %55, %cst_21 [1] : vector<8x8xf32> to vector<8xf32>
    %57 = vector.shape_cast %56 : vector<8xf32> to vector<8x1xf32>
    %58 = vector.broadcast %57 : vector<8x1xf32> to vector<8x8xf32>
    %59 = arith.subf %55, %58 : vector<8x8xf32>
    %60 = math.exp %59 : vector<8x8xf32>
    %cst_22 = arith.constant dense<0.000000e+00> : vector<8xf32>
    %61 = vector.multi_reduction <add>, %60, %cst_22 [1] : vector<8x8xf32> to vector<8xf32>
    %62 = vector.shape_cast %61 : vector<8xf32> to vector<8x1xf32>
    %63 = tpu.reciprocal %62 {approx = true} : vector<8x1xf32> -> vector<8x1xf32>
    %64 = vector.broadcast %63 : vector<8x1xf32> to vector<8x8xf32>
    %65 = arith.mulf %60, %64 : vector<8x8xf32>
    %cst_23 = arith.constant dense<0.000000e+00> : vector<8x16xf32>
    %66 = tpu.matmul %65, %53, %cst_23 {dimension_numbers = #tpu.dot_dimension_numbers<[1], [0], [0], [1], [0, 0, 1, 1], [], []>} : vector<8x8xf32>, vector<8x16xf32>, vector<8x16xf32> -> vector<8x16xf32>
    %67 = tpu.concatenate %47, %66 in 0 : vector<8x16xf32>, vector<8x16xf32> -> vector<16x16xf32>
    %c0_24 = arith.constant 0 : index
    %c0_25 = arith.constant 0 : index
    %68 = vector.load %arg5[%c0_24, %c0_25] : memref<64x32xf32, #tpu.memory_space<vmem>>, vector<16x32xf32>
    %cst_26 = arith.constant dense<0.000000e+00> : vector<16x32xf32>
    %69 = tpu.matmul %67, %68, %cst_26 {dimension_numbers = #tpu.dot_dimension_numbers<[1], [0], [0], [1], [0, 0, 1, 1], [], []>} : vector<16x16xf32>, vector<16x32xf32>, vector<16x32xf32> -> vector<16x32xf32>
    %70 = arith.addf %28, %69 : vector<16x32xf32>
    %71 = vector.extract_strided_slice %27 {offsets = [0, 0], sizes = [8, 192], strides = [1, 1]} : vector<16x192xf32> to vector<8x192xf32>
    %72 = vector.extract_strided_slice %71 {offsets = [0, 16], sizes = [8, 16], strides = [1, 1]} : vector<8x192xf32> to vector<8x16xf32>
    %cst_27 = arith.constant 2.500000e-01 : f32
    %73 = vector.broadcast %cst_27 : f32 to vector<8x16xf32>
    %74 = arith.mulf %72, %73 : vector<8x16xf32>
    %75 = vector.extract_strided_slice %71 {offsets = [0, 80], sizes = [8, 16], strides = [1, 1]} : vector<8x192xf32> to vector<8x16xf32>
    %76 = vector.extract_strided_slice %71 {offsets = [0, 144], sizes = [8, 16], strides = [1, 1]} : vector<8x192xf32> to vector<8x16xf32>
    %77 = tpu.transpose %75, [1, 0] : vector<8x16xf32> -> vector<16x8xf32>
    %cst_28 = arith.constant dense<0.000000e+00> : vector<8x8xf32>
    %78 = tpu.matmul %74, %77, %cst_28 {dimension_numbers = #tpu.dot_dimension_numbers<[1], [0], [0], [1], [0, 0, 1, 1], [], []>} : vector<8x16xf32>, vector<16x8xf32>, vector<8x8xf32> -> vector<8x8xf32>
    %cst_29 = arith.constant dense<0xFF800000> : vector<8xf32>
    %79 = vector.multi_reduction <maximumf>, %78, %cst_29 [1] : vector<8x8xf32> to vector<8xf32>
    %80 = vector.shape_cast %79 : vector<8xf32> to vector<8x1xf32>
    %81 = vector.broadcast %80 : vector<8x1xf32> to vector<8x8xf32>
    %82 = arith.subf %78, %81 : vector<8x8xf32>
    %83 = math.exp %82 : vector<8x8xf32>
    %cst_30 = arith.constant dense<0.000000e+00> : vector<8xf32>
    %84 = vector.multi_reduction <add>, %83, %cst_30 [1] : vector<8x8xf32> to vector<8xf32>
    %85 = vector.shape_cast %84 : vector<8xf32> to vector<8x1xf32>
    %86 = tpu.reciprocal %85 {approx = true} : vector<8x1xf32> -> vector<8x1xf32>
    %87 = vector.broadcast %86 : vector<8x1xf32> to vector<8x8xf32>
    %88 = arith.mulf %83, %87 : vector<8x8xf32>
    %cst_31 = arith.constant dense<0.000000e+00> : vector<8x16xf32>
    %89 = tpu.matmul %88, %76, %cst_31 {dimension_numbers = #tpu.dot_dimension_numbers<[1], [0], [0], [1], [0, 0, 1, 1], [], []>} : vector<8x8xf32>, vector<8x16xf32>, vector<8x16xf32> -> vector<8x16xf32>
    %90 = vector.extract_strided_slice %27 {offsets = [8, 0], sizes = [8, 192], strides = [1, 1]} : vector<16x192xf32> to vector<8x192xf32>
    %91 = vector.extract_strided_slice %90 {offsets = [0, 16], sizes = [8, 16], strides = [1, 1]} : vector<8x192xf32> to vector<8x16xf32>
    %cst_32 = arith.constant 2.500000e-01 : f32
    %92 = vector.broadcast %cst_32 : f32 to vector<8x16xf32>
    %93 = arith.mulf %91, %92 : vector<8x16xf32>
    %94 = vector.extract_strided_slice %90 {offsets = [0, 80], sizes = [8, 16], strides = [1, 1]} : vector<8x192xf32> to vector<8x16xf32>
    %95 = vector.extract_strided_slice %90 {offsets = [0, 144], sizes = [8, 16], strides = [1, 1]} : vector<8x192xf32> to vector<8x16xf32>
    %96 = tpu.transpose %94, [1, 0] : vector<8x16xf32> -> vector<16x8xf32>
    %cst_33 = arith.constant dense<0.000000e+00> : vector<8x8xf32>
    %97 = tpu.matmul %93, %96, %cst_33 {dimension_numbers = #tpu.dot_dimension_numbers<[1], [0], [0], [1], [0, 0, 1, 1], [], []>} : vector<8x16xf32>, vector<16x8xf32>, vector<8x8xf32> -> vector<8x8xf32>
    %cst_34 = arith.constant dense<0xFF800000> : vector<8xf32>
    %98 = vector.multi_reduction <maximumf>, %97, %cst_34 [1] : vector<8x8xf32> to vector<8xf32>
    %99 = vector.shape_cast %98 : vector<8xf32> to vector<8x1xf32>
    %100 = vector.broadcast %99 : vector<8x1xf32> to vector<8x8xf32>
    %101 = arith.subf %97, %100 : vector<8x8xf32>
    %102 = math.exp %101 : vector<8x8xf32>
    %cst_35 = arith.constant dense<0.000000e+00> : vector<8xf32>
    %103 = vector.multi_reduction <add>, %102, %cst_35 [1] : vector<8x8xf32> to vector<8xf32>
    %104 = vector.shape_cast %103 : vector<8xf32> to vector<8x1xf32>
    %105 = tpu.reciprocal %104 {approx = true} : vector<8x1xf32> -> vector<8x1xf32>
    %106 = vector.broadcast %105 : vector<8x1xf32> to vector<8x8xf32>
    %107 = arith.mulf %102, %106 : vector<8x8xf32>
    %cst_36 = arith.constant dense<0.000000e+00> : vector<8x16xf32>
    %108 = tpu.matmul %107, %95, %cst_36 {dimension_numbers = #tpu.dot_dimension_numbers<[1], [0], [0], [1], [0, 0, 1, 1], [], []>} : vector<8x8xf32>, vector<8x16xf32>, vector<8x16xf32> -> vector<8x16xf32>
    %109 = tpu.concatenate %89, %108 in 0 : vector<8x16xf32>, vector<8x16xf32> -> vector<16x16xf32>
    %c16 = arith.constant 16 : index
    %c0_37 = arith.constant 0 : index
    %110 = vector.load %arg5[%c16, %c0_37] : memref<64x32xf32, #tpu.memory_space<vmem>>, vector<16x32xf32>
    %cst_38 = arith.constant dense<0.000000e+00> : vector<16x32xf32>
    %111 = tpu.matmul %109, %110, %cst_38 {dimension_numbers = #tpu.dot_dimension_numbers<[1], [0], [0], [1], [0, 0, 1, 1], [], []>} : vector<16x16xf32>, vector<16x32xf32>, vector<16x32xf32> -> vector<16x32xf32>
    %112 = arith.addf %70, %111 : vector<16x32xf32>
    %113 = vector.extract_strided_slice %27 {offsets = [0, 0], sizes = [8, 192], strides = [1, 1]} : vector<16x192xf32> to vector<8x192xf32>
    %114 = vector.extract_strided_slice %113 {offsets = [0, 32], sizes = [8, 16], strides = [1, 1]} : vector<8x192xf32> to vector<8x16xf32>
    %cst_39 = arith.constant 2.500000e-01 : f32
    %115 = vector.broadcast %cst_39 : f32 to vector<8x16xf32>
    %116 = arith.mulf %114, %115 : vector<8x16xf32>
    %117 = vector.extract_strided_slice %113 {offsets = [0, 96], sizes = [8, 16], strides = [1, 1]} : vector<8x192xf32> to vector<8x16xf32>
    %118 = vector.extract_strided_slice %113 {offsets = [0, 160], sizes = [8, 16], strides = [1, 1]} : vector<8x192xf32> to vector<8x16xf32>
    %119 = tpu.transpose %117, [1, 0] : vector<8x16xf32> -> vector<16x8xf32>
    %cst_40 = arith.constant dense<0.000000e+00> : vector<8x8xf32>
    %120 = tpu.matmul %116, %119, %cst_40 {dimension_numbers = #tpu.dot_dimension_numbers<[1], [0], [0], [1], [0, 0, 1, 1], [], []>} : vector<8x16xf32>, vector<16x8xf32>, vector<8x8xf32> -> vector<8x8xf32>
    %cst_41 = arith.constant dense<0xFF800000> : vector<8xf32>
    %121 = vector.multi_reduction <maximumf>, %120, %cst_41 [1] : vector<8x8xf32> to vector<8xf32>
    %122 = vector.shape_cast %121 : vector<8xf32> to vector<8x1xf32>
    %123 = vector.broadcast %122 : vector<8x1xf32> to vector<8x8xf32>
    %124 = arith.subf %120, %123 : vector<8x8xf32>
    %125 = math.exp %124 : vector<8x8xf32>
    %cst_42 = arith.constant dense<0.000000e+00> : vector<8xf32>
    %126 = vector.multi_reduction <add>, %125, %cst_42 [1] : vector<8x8xf32> to vector<8xf32>
    %127 = vector.shape_cast %126 : vector<8xf32> to vector<8x1xf32>
    %128 = tpu.reciprocal %127 {approx = true} : vector<8x1xf32> -> vector<8x1xf32>
    %129 = vector.broadcast %128 : vector<8x1xf32> to vector<8x8xf32>
    %130 = arith.mulf %125, %129 : vector<8x8xf32>
    %cst_43 = arith.constant dense<0.000000e+00> : vector<8x16xf32>
    %131 = tpu.matmul %130, %118, %cst_43 {dimension_numbers = #tpu.dot_dimension_numbers<[1], [0], [0], [1], [0, 0, 1, 1], [], []>} : vector<8x8xf32>, vector<8x16xf32>, vector<8x16xf32> -> vector<8x16xf32>
    %132 = vector.extract_strided_slice %27 {offsets = [8, 0], sizes = [8, 192], strides = [1, 1]} : vector<16x192xf32> to vector<8x192xf32>
    %133 = vector.extract_strided_slice %132 {offsets = [0, 32], sizes = [8, 16], strides = [1, 1]} : vector<8x192xf32> to vector<8x16xf32>
    %cst_44 = arith.constant 2.500000e-01 : f32
    %134 = vector.broadcast %cst_44 : f32 to vector<8x16xf32>
    %135 = arith.mulf %133, %134 : vector<8x16xf32>
    %136 = vector.extract_strided_slice %132 {offsets = [0, 96], sizes = [8, 16], strides = [1, 1]} : vector<8x192xf32> to vector<8x16xf32>
    %137 = vector.extract_strided_slice %132 {offsets = [0, 160], sizes = [8, 16], strides = [1, 1]} : vector<8x192xf32> to vector<8x16xf32>
    %138 = tpu.transpose %136, [1, 0] : vector<8x16xf32> -> vector<16x8xf32>
    %cst_45 = arith.constant dense<0.000000e+00> : vector<8x8xf32>
    %139 = tpu.matmul %135, %138, %cst_45 {dimension_numbers = #tpu.dot_dimension_numbers<[1], [0], [0], [1], [0, 0, 1, 1], [], []>} : vector<8x16xf32>, vector<16x8xf32>, vector<8x8xf32> -> vector<8x8xf32>
    %cst_46 = arith.constant dense<0xFF800000> : vector<8xf32>
    %140 = vector.multi_reduction <maximumf>, %139, %cst_46 [1] : vector<8x8xf32> to vector<8xf32>
    %141 = vector.shape_cast %140 : vector<8xf32> to vector<8x1xf32>
    %142 = vector.broadcast %141 : vector<8x1xf32> to vector<8x8xf32>
    %143 = arith.subf %139, %142 : vector<8x8xf32>
    %144 = math.exp %143 : vector<8x8xf32>
    %cst_47 = arith.constant dense<0.000000e+00> : vector<8xf32>
    %145 = vector.multi_reduction <add>, %144, %cst_47 [1] : vector<8x8xf32> to vector<8xf32>
    %146 = vector.shape_cast %145 : vector<8xf32> to vector<8x1xf32>
    %147 = tpu.reciprocal %146 {approx = true} : vector<8x1xf32> -> vector<8x1xf32>
    %148 = vector.broadcast %147 : vector<8x1xf32> to vector<8x8xf32>
    %149 = arith.mulf %144, %148 : vector<8x8xf32>
    %cst_48 = arith.constant dense<0.000000e+00> : vector<8x16xf32>
    %150 = tpu.matmul %149, %137, %cst_48 {dimension_numbers = #tpu.dot_dimension_numbers<[1], [0], [0], [1], [0, 0, 1, 1], [], []>} : vector<8x8xf32>, vector<8x16xf32>, vector<8x16xf32> -> vector<8x16xf32>
    %151 = tpu.concatenate %131, %150 in 0 : vector<8x16xf32>, vector<8x16xf32> -> vector<16x16xf32>
    %c32 = arith.constant 32 : index
    %c0_49 = arith.constant 0 : index
    %152 = vector.load %arg5[%c32, %c0_49] : memref<64x32xf32, #tpu.memory_space<vmem>>, vector<16x32xf32>
    %cst_50 = arith.constant dense<0.000000e+00> : vector<16x32xf32>
    %153 = tpu.matmul %151, %152, %cst_50 {dimension_numbers = #tpu.dot_dimension_numbers<[1], [0], [0], [1], [0, 0, 1, 1], [], []>} : vector<16x16xf32>, vector<16x32xf32>, vector<16x32xf32> -> vector<16x32xf32>
    %154 = arith.addf %112, %153 : vector<16x32xf32>
    %155 = vector.extract_strided_slice %27 {offsets = [0, 0], sizes = [8, 192], strides = [1, 1]} : vector<16x192xf32> to vector<8x192xf32>
    %156 = vector.extract_strided_slice %155 {offsets = [0, 48], sizes = [8, 16], strides = [1, 1]} : vector<8x192xf32> to vector<8x16xf32>
    %cst_51 = arith.constant 2.500000e-01 : f32
    %157 = vector.broadcast %cst_51 : f32 to vector<8x16xf32>
    %158 = arith.mulf %156, %157 : vector<8x16xf32>
    %159 = vector.extract_strided_slice %155 {offsets = [0, 112], sizes = [8, 16], strides = [1, 1]} : vector<8x192xf32> to vector<8x16xf32>
    %160 = vector.extract_strided_slice %155 {offsets = [0, 176], sizes = [8, 16], strides = [1, 1]} : vector<8x192xf32> to vector<8x16xf32>
    %161 = tpu.transpose %159, [1, 0] : vector<8x16xf32> -> vector<16x8xf32>
    %cst_52 = arith.constant dense<0.000000e+00> : vector<8x8xf32>
    %162 = tpu.matmul %158, %161, %cst_52 {dimension_numbers = #tpu.dot_dimension_numbers<[1], [0], [0], [1], [0, 0, 1, 1], [], []>} : vector<8x16xf32>, vector<16x8xf32>, vector<8x8xf32> -> vector<8x8xf32>
    %cst_53 = arith.constant dense<0xFF800000> : vector<8xf32>
    %163 = vector.multi_reduction <maximumf>, %162, %cst_53 [1] : vector<8x8xf32> to vector<8xf32>
    %164 = vector.shape_cast %163 : vector<8xf32> to vector<8x1xf32>
    %165 = vector.broadcast %164 : vector<8x1xf32> to vector<8x8xf32>
    %166 = arith.subf %162, %165 : vector<8x8xf32>
    %167 = math.exp %166 : vector<8x8xf32>
    %cst_54 = arith.constant dense<0.000000e+00> : vector<8xf32>
    %168 = vector.multi_reduction <add>, %167, %cst_54 [1] : vector<8x8xf32> to vector<8xf32>
    %169 = vector.shape_cast %168 : vector<8xf32> to vector<8x1xf32>
    %170 = tpu.reciprocal %169 {approx = true} : vector<8x1xf32> -> vector<8x1xf32>
    %171 = vector.broadcast %170 : vector<8x1xf32> to vector<8x8xf32>
    %172 = arith.mulf %167, %171 : vector<8x8xf32>
    %cst_55 = arith.constant dense<0.000000e+00> : vector<8x16xf32>
    %173 = tpu.matmul %172, %160, %cst_55 {dimension_numbers = #tpu.dot_dimension_numbers<[1], [0], [0], [1], [0, 0, 1, 1], [], []>} : vector<8x8xf32>, vector<8x16xf32>, vector<8x16xf32> -> vector<8x16xf32>
    %174 = vector.extract_strided_slice %27 {offsets = [8, 0], sizes = [8, 192], strides = [1, 1]} : vector<16x192xf32> to vector<8x192xf32>
    %175 = vector.extract_strided_slice %174 {offsets = [0, 48], sizes = [8, 16], strides = [1, 1]} : vector<8x192xf32> to vector<8x16xf32>
    %cst_56 = arith.constant 2.500000e-01 : f32
    %176 = vector.broadcast %cst_56 : f32 to vector<8x16xf32>
    %177 = arith.mulf %175, %176 : vector<8x16xf32>
    %178 = vector.extract_strided_slice %174 {offsets = [0, 112], sizes = [8, 16], strides = [1, 1]} : vector<8x192xf32> to vector<8x16xf32>
    %179 = vector.extract_strided_slice %174 {offsets = [0, 176], sizes = [8, 16], strides = [1, 1]} : vector<8x192xf32> to vector<8x16xf32>
    %180 = tpu.transpose %178, [1, 0] : vector<8x16xf32> -> vector<16x8xf32>
    %cst_57 = arith.constant dense<0.000000e+00> : vector<8x8xf32>
    %181 = tpu.matmul %177, %180, %cst_57 {dimension_numbers = #tpu.dot_dimension_numbers<[1], [0], [0], [1], [0, 0, 1, 1], [], []>} : vector<8x16xf32>, vector<16x8xf32>, vector<8x8xf32> -> vector<8x8xf32>
    %cst_58 = arith.constant dense<0xFF800000> : vector<8xf32>
    %182 = vector.multi_reduction <maximumf>, %181, %cst_58 [1] : vector<8x8xf32> to vector<8xf32>
    %183 = vector.shape_cast %182 : vector<8xf32> to vector<8x1xf32>
    %184 = vector.broadcast %183 : vector<8x1xf32> to vector<8x8xf32>
    %185 = arith.subf %181, %184 : vector<8x8xf32>
    %186 = math.exp %185 : vector<8x8xf32>
    %cst_59 = arith.constant dense<0.000000e+00> : vector<8xf32>
    %187 = vector.multi_reduction <add>, %186, %cst_59 [1] : vector<8x8xf32> to vector<8xf32>
    %188 = vector.shape_cast %187 : vector<8xf32> to vector<8x1xf32>
    %189 = tpu.reciprocal %188 {approx = true} : vector<8x1xf32> -> vector<8x1xf32>
    %190 = vector.broadcast %189 : vector<8x1xf32> to vector<8x8xf32>
    %191 = arith.mulf %186, %190 : vector<8x8xf32>
    %cst_60 = arith.constant dense<0.000000e+00> : vector<8x16xf32>
    %192 = tpu.matmul %191, %179, %cst_60 {dimension_numbers = #tpu.dot_dimension_numbers<[1], [0], [0], [1], [0, 0, 1, 1], [], []>} : vector<8x8xf32>, vector<8x16xf32>, vector<8x16xf32> -> vector<8x16xf32>
    %193 = tpu.concatenate %173, %192 in 0 : vector<8x16xf32>, vector<8x16xf32> -> vector<16x16xf32>
    %c48 = arith.constant 48 : index
    %c0_61 = arith.constant 0 : index
    %194 = vector.load %arg5[%c48, %c0_61] : memref<64x32xf32, #tpu.memory_space<vmem>>, vector<16x32xf32>
    %cst_62 = arith.constant dense<0.000000e+00> : vector<16x32xf32>
    %195 = tpu.matmul %193, %194, %cst_62 {dimension_numbers = #tpu.dot_dimension_numbers<[1], [0], [0], [1], [0, 0, 1, 1], [], []>} : vector<16x16xf32>, vector<16x32xf32>, vector<16x32xf32> -> vector<16x32xf32>
    %196 = arith.addf %154, %195 : vector<16x32xf32>
    %197 = vector.shape_cast %196 : vector<16x32xf32> to vector<2x8x32xf32>
    %c0_63 = arith.constant 0 : index
    %c0_64 = arith.constant 0 : index
    %c0_65 = arith.constant 0 : index
    %198 = vector.load %arg6[%c0_63, %c0_64, %c0_65] : memref<2x8x32xf32, #tpu.memory_space<vmem>>, vector<2x8x32xf32>
    tpu.vector_store %arg6[%c0_63, %c0_64, %c0_65], %197 {strides = array<i32>} : memref<2x8x32xf32, #tpu.memory_space<vmem>>, vector<2x8x32xf32>,
    return
  }
  func.func @transform_0(%arg0: i32) -> (i32, i32, i32) {
    %c0_i32 = arith.constant 0 : i32
    %c0_i32_0 = arith.constant 0 : i32
    %c0_i32_1 = arith.constant 0 : i32
    return %arg0, %c0_i32, %c0_i32_0 : i32, i32, i32
  }
  func.func @transform_1(%arg0: i32) -> (i32, i32) {
    %c0_i32 = arith.constant 0 : i32
    %c0_i32_0 = arith.constant 0 : i32
    %c0_i32_1 = arith.constant 0 : i32
    return %c0_i32, %c0_i32_0 : i32, i32
  }
  func.func @transform_2(%arg0: i32) -> (i32, i32) {
    %c0_i32 = arith.constant 0 : i32
    %c0_i32_0 = arith.constant 0 : i32
    %c0_i32_1 = arith.constant 0 : i32
    return %c0_i32, %c0_i32_0 : i32, i32
  }
  func.func @transform_3(%arg0: i32) -> (i32, i32) {
    %c0_i32 = arith.constant 0 : i32
    %c0_i32_0 = arith.constant 0 : i32
    %c0_i32_1 = arith.constant 0 : i32
    return %c0_i32, %c0_i32_0 : i32, i32
  }
  func.func @transform_4(%arg0: i32) -> (i32, i32) {
    %c0_i32 = arith.constant 0 : i32
    %c0_i32_0 = arith.constant 0 : i32
    %c0_i32_1 = arith.constant 0 : i32
    return %c0_i32, %c0_i32_0 : i32, i32
  }
  func.func @transform_5(%arg0: i32) -> (i32, i32, i32) {
    %c0_i32 = arith.constant 0 : i32
    %c0_i32_0 = arith.constant 0 : i32
    %c0_i32_1 = arith.constant 0 : i32
    return %arg0, %c0_i32, %c0_i32_0 : i32, i32, i32
  }
}

</mosaic_0001>

<llo_original>
// kernel: tpu_custom_call.1
$region0: #{tpu_custom_call.1}
  #allocation0 [shape = 'u32[]', space=smem, size = 0x4, offset = 0x4, fixed_abs, tag = 'smem constant byte address 0x4 - core index']
  #allocation1 [shape = 'u32[144,128]{1,0:T(1,128)}', space=vmem, size = 0x12000, scoped, tag = 'internal scratch']
  %s0 = inlined_call_operand.vmem [shape: f32[2,8,32], index: 0, kind: input, shape index: {}]
  %s1 = inlined_call_operand.vmem [shape: f32[1,32], index: 1, kind: input, shape index: {}]
  %s2 = inlined_call_operand.vmem [shape: f32[1,32], index: 2, kind: input, shape index: {}]
  %s3 = inlined_call_operand.vmem [shape: f32[32,192], index: 3, kind: input, shape index: {}]
  %s4 = inlined_call_operand.vmem [shape: f32[64,32], index: 4, kind: input, shape index: {}]
  %s5 = inlined_call_operand.hbm [shape: f32[2,8,32], index: 5, kind: output, shape index: {}]
  %s6 = sld [smem:[#allocation0]]
  $region30: #{tpu_custom_call.1} parent=0
    _
  %s8 = ssub.s32 1, %s6
  %s9 = scalar_select 0, %s8, %s6
  $region1: #{tpu_custom_call.1} parent=0
    #allocation2 [shape = 'u8[8192]{0}', space=vmem, size = 0x2000, scoped, tag = 'output window, operand 0, single buffered']
    #allocation3 [shape = 's32[1]{0}', space=sflag, size = 0x4, scoped, tag = 'scoped memory for tpu_custom_call.1']
    %10 = vsyncpa [#allocation3], 0
    // Predicated region
    $region2: #{tpu_custom_call.1} parent=1 // pred_check
      _
    $region3: #{tpu_custom_call.1} parent=1 // pred_check_branch
      %12 = sbr.rel (0) target = $region5
    $region4: #{tpu_custom_call.1} parent=1 // pred_region
      _
    $region5: #{tpu_custom_call.1} parent=1 // pred_fallthru
      _
    // Predicated region
    $region6: #{tpu_custom_call.1} parent=1 // pred_check
      _
    $region7: #{tpu_custom_call.1} parent=1 // pred_check_branch
      %14 = sbr.rel (0) target = $region9
    $region8: #{tpu_custom_call.1} parent=1 // pred_region
      _
    $region9: #{tpu_custom_call.1} parent=1 // pred_fallthru
      _
    // Predicated region
    $region10: #{tpu_custom_call.1} parent=1 // pred_check
      _
    $region11: #{tpu_custom_call.1} parent=1 // pred_check_branch
      %16 = sbr.rel (0) target = $region13
    $region12: #{tpu_custom_call.1} parent=1 // pred_region
      _
    $region13: #{tpu_custom_call.1} parent=1 // pred_fallthru
      _
    // Predicated region
    $region14: #{tpu_custom_call.1} parent=1 // pred_check
      _
    $region15: #{tpu_custom_call.1} parent=1 // pred_check_branch
      %18 = sbr.rel (0) target = $region17
    $region16: #{tpu_custom_call.1} parent=1 // pred_region
      _
    $region17: #{tpu_custom_call.1} parent=1 // pred_fallthru
      _
    // Predicated region
    $region18: #{tpu_custom_call.1} parent=1 // pred_check
      _
    $region19: #{tpu_custom_call.1} parent=1 // pred_check_branch
      %20 = sbr.rel (0) target = $region21
    $region20: #{tpu_custom_call.1} parent=1 // pred_region
      _
    $region21: #{tpu_custom_call.1} parent=1 // pred_fallthru
      _
    %v21 = vld [vmem:[%s0] sm:$0xff]
    %v22 = vld [vmem:[%s0 + $0x8] sm:$0xff]
    %vm23 = vcmask 261120
    %v24 = vsel %vm23, %v21, 0.0
    %25 = vadd.xlane.f32.xlu0 %v24
    %v26 = vpop.xlane.xlu0 %25
    %v27 = vsel %vm23, %v22, 0.0
    %28 = vadd.xlane.f32.xlu0 %v27
    %v29 = vpop.xlane.xlu0 %28
    %v30 = vrcp.pop 32.0
    %v31 = vmul.f32 %v26, %v30
    %v32 = vmul.f32 %v29, %v30
    %v33 = vsub.f32 %v21, %v31
    %v34 = vsub.f32 %v22, %v32
    %v35 = vmul.f32 %v33, %v33
    %v36 = vmul.f32 %v34, %v34
    %v37 = vsel %vm23, %v35, 0.0
    %38 = vadd.xlane.f32.xlu0 %v37
    %v39 = vpop.xlane.xlu0 %38
    %v40 = vsel %vm23, %v36, 0.0
    %41 = vadd.xlane.f32.xlu0 %v40
    %v42 = vpop.xlane.xlu0 %41
    %v43 = vmul.f32 %v39, %v30
    %v44 = vmul.f32 %v42, %v30
    %v45 = vadd.f32 %v43, 1e-05
    %v46 = vadd.f32 %v44, 1e-05
    %v47 = vrsqrt.pop %v45
    %v48 = vrsqrt.pop %v46
    %v49 = vmul.f32 %v33, %v47
    %v50 = vmul.f32 %v34, %v48
    %v51 = vld [vmem:[%s1] sm:$0x1]
    %v53 = vlaneseq
    %v54 = vshrl.u32 %v53, 7
    %v55 = vsub.s32 0, %v54
    %v56 = vrot.slane %v51, %v55
    %v58 = vmul.f32 %v49, %v56
    %v59 = vmul.f32 %v50, %v56
    %v60 = vld [vmem:[%s2] sm:$0x1]
    %v62 = vlaneseq
    %v63 = vshrl.u32 %v62, 7
    %v64 = vsub.s32 0, %v63
    %v65 = vrot.slane %v60, %v64
    %v67 = vadd.f32 %v58, %v65
    %v68 = vadd.f32 %v59, %v65
    %v69 = vld [vmem:[%s3] sm:$0xff]
    %v70 = vld [vmem:[%s3 + $0x8] sm:$0xff]
    %v71 = vld [vmem:[%s3 + $0x10] sm:$0xff]
    %v72 = vld [vmem:[%s3 + $0x18] sm:$0xff]
    %v73 = vld [vmem:[%s3 + $0x20] sm:$0xff]
    %v74 = vld [vmem:[%s3 + $0x28] sm:$0xff]
    %v75 = vld [vmem:[%s3 + $0x30] sm:$0xff]
    %v76 = vld [vmem:[%s3 + $0x38] sm:$0xff]
    %v78 = vsel %vm23, %v67, 0
    %v81 = vsel %vm23, %v68, 0
    %83 = vmatprep.subr.mxu0 %v70
    %84 = vmatpush1.msra.mxu0 %v69
    %85 = vmatprep.subr.mxu0 %v72
    %86 = vmatpush1.msra.mxu0 %v71
    %87 = vmatprep.subr.mxu0 %v74
    %88 = vmatpush1.msra.mxu0 %v73
    %89 = vmatprep.subr.mxu0 %v76
    %90 = vmatpush1.msra.mxu0 %v75
    %91 = vmatprep.subr.mxu0 0.0
    %92 = vmatpush1.msra.mxu0 0.0
    %93 = vmatprep.subr.mxu0 0.0
    %94 = vmatpush1.msra.mxu0 0.0
    %95 = vmatprep.subr.mxu0 0.0
    %96 = vmatpush1.msra.mxu0 0.0
    %97 = vmatprep.subr.mxu0 0.0
    %98 = vmatpush1.msra.mxu0 0.0
    %99 = vmatprep.subr.mxu0 0.0
    %100 = vmatpush1.msra.mxu0 0.0
    %101 = vmatprep.subr.mxu0 0.0
    %102 = vmatpush1.msra.mxu0 0.0
    %103 = vmatprep.subr.mxu0 0.0
    %104 = vmatpush1.msra.mxu0 0.0
    %105 = vmatprep.subr.mxu0 0.0
    %106 = vmatpush1.msra.mxu0 0.0
    %107 = vmatprep.subr.mxu0 0.0
    %108 = vmatpush1.msra.mxu0 0.0
    %109 = vmatprep.subr.mxu0 0.0
    %110 = vmatpush1.msra.mxu0 0.0
    %111 = vmatprep.subr.mxu0 0.0
    %112 = vmatpush1.msra.mxu0 0.0
    %113 = vmatprep.subr.mxu0 0.0
    %114 = vmatpush1.msra.mxu0 0.0
    %115 = vmatprep.subr.mxu0 0.0
    %116 = vmatpush1.msra.mxu0 0.0
    %117 = vmatprep.subr.mxu0 0.0
    %118 = vmatpush1.msra.mxu0 0.0
    %119 = vmatprep.subr.mxu0 0.0
    %120 = vmatpush1.msra.mxu0 0.0
    %121 = vmatprep.subr.mxu0 0.0
    %122 = vmatpush1.msra.mxu0 0.0
    %123 = vmatprep.subr.mxu0 0.0
    %124 = vmatpush1.msra.mxu0 0.0
    %125 = vmatprep.subr.mxu0 0.0
    %126 = vmatpush1.msra.mxu0 0.0
    %127 = vmatprep.subr.mxu0 0.0
    %128 = vmatpush1.msra.mxu0 0.0
    %129 = vmatprep.subr.mxu0 0.0
    %130 = vmatpush1.msra.mxu0 0.0
    %131 = vmatprep.subr.mxu0 0.0
    %132 = vmatpush1.msra.mxu0 0.0
    %133 = vmatprep.subr.mxu0 0.0
    %134 = vmatpush1.msra.mxu0 0.0
    %135 = vmatprep.subr.mxu0 0.0
    %136 = vmatpush1.msra.mxu0 0.0
    %137 = vmatprep.subr.mxu0 0.0
    %138 = vmatpush1.msra.mxu0 0.0
    %139 = vmatprep.subr.mxu0 0.0
    %140 = vmatpush1.msra.mxu0 0.0
    %141 = vmatprep.subr.mxu0 0.0
    %142 = vmatpush1.msra.mxu0 0.0
    %143 = vmatprep.subr.mxu0 0.0
    %144 = vmatpush1.msra.mxu0 0.0
    %145 = vmatprep.subr.mxu0 0.0
    %146 = vmatpush1.msra.mxu0 0.0
    %147 = vmatprep.mubr.f32.mxu0 0.0
    %148 = vmatmul.mubr.f32.gmra.mrb[0].mxu0 %v78
    %v149 = vpop.f32.mrb[0].mxu0
    %v150 = vadd.f32 0.0, %v149
    %v151 = vpop.f32.mrb[0].mxu0
    %v152 = vadd.f32 0.0, %v151
    %153 = vmatprep.mubr.f32.mxu0 0.0
    %154 = vmatmul.mubr.f32.gmra.mrb[0].mxu0 %v81
    %v155 = vpop.f32.mrb[0].mxu0
    %v156 = vadd.f32 0.0, %v155
    %v157 = vpop.f32.mrb[0].mxu0
    %v158 = vadd.f32 0.0, %v157
    %159 = vdwg.mxu0
    %v160 = vmul.f32 %v150, 0.25
    %162 = vrot.lane.b32.xlu0 %v150, 64
    %v163 = vpop.permute.xlu0 %162
    %vm164 = vcmask 130048
    %v166 = vsel %vm164, %v160, 0
    %v168 = vsel %vm164, %v163, 0
    %170 = vmatprep.subr.mxu0 0.0
    %171 = vmatpush1.xpose.msra.mxu0 %v168
    %172 = vmatprep.subr.mxu0 0.0
    %173 = vmatpush1.xpose.msra.mxu0 0.0
    %174 = vmatprep.subr.mxu0 0.0
    %175 = vmatpush1.xpose.msra.mxu0 0.0
    %176 = vmatprep.subr.mxu0 0.0
    %177 = vmatpush1.xpose.msra.mxu0 0.0
    %178 = vmatprep.subr.mxu0 0.0
    %179 = vmatpush1.xpose.msra.mxu0 0.0
    %180 = vmatprep.subr.mxu0 0.0
    %181 = vmatpush1.xpose.msra.mxu0 0.0
    %182 = vmatprep.subr.mxu0 0.0
    %183 = vmatpush1.xpose.msra.mxu0 0.0
    %184 = vmatprep.subr.mxu0 0.0
    %185 = vmatpush1.xpose.msra.mxu0 0.0
    %186 = vmatprep.subr.mxu0 0.0
    %187 = vmatpush1.xpose.msra.mxu0 0.0
    %188 = vmatprep.subr.mxu0 0.0
    %189 = vmatpush1.xpose.msra.mxu0 0.0
    %190 = vmatprep.subr.mxu0 0.0
    %191 = vmatpush1.xpose.msra.mxu0 0.0
    %192 = vmatprep.subr.mxu0 0.0
    %193 = vmatpush1.xpose.msra.mxu0 0.0
    %194 = vmatprep.subr.mxu0 0.0
    %195 = vmatpush1.xpose.msra.mxu0 0.0
    %196 = vmatprep.subr.mxu0 0.0
    %197 = vmatpush1.xpose.msra.mxu0 0.0
    %198 = vmatprep.subr.mxu0 0.0
    %199 = vmatpush1.xpose.msra.mxu0 0.0
    %200 = vmatprep.subr.mxu0 0.0
    %201 = vmatpush1.xpose.msra.mxu0 0.0
    %202 = vmatprep.subr.mxu0 0.0
    %203 = vmatpush1.xpose.msra.mxu0 0.0
    %204 = vmatprep.subr.mxu0 0.0
    %205 = vmatpush1.xpose.msra.mxu0 0.0
    %206 = vmatprep.subr.mxu0 0.0
    %207 = vmatpush1.xpose.msra.mxu0 0.0
    %208 = vmatprep.subr.mxu0 0.0
    %209 = vmatpush1.xpose.msra.mxu0 0.0
    %210 = vmatprep.subr.mxu0 0.0
    %211 = vmatpush1.xpose.msra.mxu0 0.0
    %212 = vmatprep.subr.mxu0 0.0
    %213 = vmatpush1.xpose.msra.mxu0 0.0
    %214 = vmatprep.subr.mxu0 0.0
    %215 = vmatpush1.xpose.msra.mxu0 0.0
    %216 = vmatprep.subr.mxu0 0.0
    %217 = vmatpush1.xpose.msra.mxu0 0.0
    %218 = vmatprep.subr.mxu0 0.0
    %219 = vmatpush1.xpose.msra.mxu0 0.0
    %220 = vmatprep.subr.mxu0 0.0
    %221 = vmatpush1.xpose.msra.mxu0 0.0
    %222 = vmatprep.subr.mxu0 0.0
    %223 = vmatpush1.xpose.msra.mxu0 0.0
    %224 = vmatprep.subr.mxu0 0.0
    %225 = vmatpush1.xpose.msra.mxu0 0.0
    %226 = vmatprep.subr.mxu0 0.0
    %227 = vmatpush1.xpose.msra.mxu0 0.0
    %228 = vmatprep.subr.mxu0 0.0
    %229 = vmatpush1.xpose.msra.mxu0 0.0
    %230 = vmatprep.subr.mxu0 0.0
    %231 = vmatpush1.xpose.msra.mxu0 0.0
    %232 = vmatprep.subr.mxu0 0.0
    %233 = vmatpush1.xpose.msra.mxu0 0.0
    %234 = vmatprep.mubr.f32.mxu0 0.0
    %235 = vmatmul.mubr.f32.gmra.mrb[0].mxu0 %v166
    %v236 = vpop.f32.mrb[0].mxu0
    %v237 = vadd.f32 0.0, %v236
    %v238 = vpop.f32.mrb[0].mxu0
    %239 = vdwg.mxu0
    %vm240 = vcmask 64512
    %v241 = vsel %vm240, %v237, -inf
    %242 = vmax.xlane.f32.xlu0 %v241
    %v243 = vpop.xlane.xlu0 %242
    %v244 = vsub.f32 %v237, %v243
    %v245 = vmul.f32 %v244, 1.442695
    %v246 = vpow.pop %v245
    %v247 = vsel %vm240, %v246, 0.0
    %248 = vadd.xlane.f32.xlu0 %v247
    %v249 = vpop.xlane.xlu0 %248
    %v250 = vrcp.pop %v249
    %v251 = vmul.f32 %v246, %v250
    %v253 = vsel %vm240, %v251, 0
    %255 = vmatprep.subr.mxu0 0.0
    %256 = vmatpush1.msra.mxu0 %v152
    %257 = vmatprep.subr.mxu0 0.0
    %258 = vmatpush1.msra.mxu0 0.0
    %259 = vmatprep.subr.mxu0 0.0
    %260 = vmatpush1.msra.mxu0 0.0
    %261 = vmatprep.subr.mxu0 0.0
    %262 = vmatpush1.msra.mxu0 0.0
    %263 = vmatprep.subr.mxu0 0.0
    %264 = vmatpush1.msra.mxu0 0.0
    %265 = vmatprep.subr.mxu0 0.0
    %266 = vmatpush1.msra.mxu0 0.0
    %267 = vmatprep.subr.mxu0 0.0
    %268 = vmatpush1.msra.mxu0 0.0
    %269 = vmatprep.subr.mxu0 0.0
    %270 = vmatpush1.msra.mxu0 0.0
    %271 = vmatprep.subr.mxu0 0.0
    %272 = vmatpush1.msra.mxu0 0.0
    %273 = vmatprep.subr.mxu0 0.0
    %274 = vmatpush1.msra.mxu0 0.0
    %275 = vmatprep.subr.mxu0 0.0
    %276 = vmatpush1.msra.mxu0 0.0
    %277 = vmatprep.subr.mxu0 0.0
    %278 = vmatpush1.msra.mxu0 0.0
    %279 = vmatprep.subr.mxu0 0.0
    %280 = vmatpush1.msra.mxu0 0.0
    %281 = vmatprep.subr.mxu0 0.0
    %282 = vmatpush1.msra.mxu0 0.0
    %283 = vmatprep.subr.mxu0 0.0
    %284 = vmatpush1.msra.mxu0 0.0
    %285 = vmatprep.subr.mxu0 0.0
    %286 = vmatpush1.msra.mxu0 0.0
    %287 = vmatprep.subr.mxu0 0.0
    %288 = vmatpush1.msra.mxu0 0.0
    %289 = vmatprep.subr.mxu0 0.0
    %290 = vmatpush1.msra.mxu0 0.0
    %291 = vmatprep.subr.mxu0 0.0
    %292 = vmatpush1.msra.mxu0 0.0
    %293 = vmatprep.subr.mxu0 0.0
    %294 = vmatpush1.msra.mxu0 0.0
    %295 = vmatprep.subr.mxu0 0.0
    %296 = vmatpush1.msra.mxu0 0.0
    %297 = vmatprep.subr.mxu0 0.0
    %298 = vmatpush1.msra.mxu0 0.0
    %299 = vmatprep.subr.mxu0 0.0
    %300 = vmatpush1.msra.mxu0 0.0
    %301 = vmatprep.subr.mxu0 0.0
    %302 = vmatpush1.msra.mxu0 0.0
    %303 = vmatprep.subr.mxu0 0.0
    %304 = vmatpush1.msra.mxu0 0.0
    %305 = vmatprep.subr.mxu0 0.0
    %306 = vmatpush1.msra.mxu0 0.0
    %307 = vmatprep.subr.mxu0 0.0
    %308 = vmatpush1.msra.mxu0 0.0
    %309 = vmatprep.subr.mxu0 0.0
    %310 = vmatpush1.msra.mxu0 0.0
    %311 = vmatprep.subr.mxu0 0.0
    %312 = vmatpush1.msra.mxu0 0.0
    %313 = vmatprep.subr.mxu0 0.0
    %314 = vmatpush1.msra.mxu0 0.0
    %315 = vmatprep.subr.mxu0 0.0
    %316 = vmatpush1.msra.mxu0 0.0
    %317 = vmatprep.subr.mxu0 0.0
    %318 = vmatpush1.msra.mxu0 0.0
    %319 = vmatprep.mubr.f32.mxu0 0.0
    %320 = vmatmul.mubr.f32.gmra.mrb[0].mxu0 %v253
    %v321 = vpop.f32.mrb[0].mxu0
    %v322 = vadd.f32 0.0, %v321
    %v323 = vpop.f32.mrb[0].mxu0
    %324 = vdwg.mxu0
    %v325 = vmul.f32 %v156, 0.25
    %327 = vrot.lane.b32.xlu0 %v156, 64
    %v328 = vpop.permute.xlu0 %327
    %v330 = vsel %vm164, %v325, 0
    %v332 = vsel %vm164, %v328, 0
    %334 = vmatprep.subr.mxu0 0.0
    %335 = vmatpush1.xpose.msra.mxu0 %v332
    %336 = vmatprep.subr.mxu0 0.0
    %337 = vmatpush1.xpose.msra.mxu0 0.0
    %338 = vmatprep.subr.mxu0 0.0
    %339 = vmatpush1.xpose.msra.mxu0 0.0
    %340 = vmatprep.subr.mxu0 0.0
    %341 = vmatpush1.xpose.msra.mxu0 0.0
    %342 = vmatprep.subr.mxu0 0.0
    %343 = vmatpush1.xpose.msra.mxu0 0.0
    %344 = vmatprep.subr.mxu0 0.0
    %345 = vmatpush1.xpose.msra.mxu0 0.0
    %346 = vmatprep.subr.mxu0 0.0
    %347 = vmatpush1.xpose.msra.mxu0 0.0
    %348 = vmatprep.subr.mxu0 0.0
    %349 = vmatpush1.xpose.msra.mxu0 0.0
    %350 = vmatprep.subr.mxu0 0.0
    %351 = vmatpush1.xpose.msra.mxu0 0.0
    %352 = vmatprep.subr.mxu0 0.0
    %353 = vmatpush1.xpose.msra.mxu0 0.0
    %354 = vmatprep.subr.mxu0 0.0
    %355 = vmatpush1.xpose.msra.mxu0 0.0
    %356 = vmatprep.subr.mxu0 0.0
    %357 = vmatpush1.xpose.msra.mxu0 0.0
    %358 = vmatprep.subr.mxu0 0.0
    %359 = vmatpush1.xpose.msra.mxu0 0.0
    %360 = vmatprep.subr.mxu0 0.0
    %361 = vmatpush1.xpose.msra.mxu0 0.0
    %362 = vmatprep.subr.mxu0 0.0
    %363 = vmatpush1.xpose.msra.mxu0 0.0
    %364 = vmatprep.subr.mxu0 0.0
    %365 = vmatpush1.xpose.msra.mxu0 0.0
    %366 = vmatprep.subr.mxu0 0.0
    %367 = vmatpush1.xpose.msra.mxu0 0.0
    %368 = vmatprep.subr.mxu0 0.0
    %369 = vmatpush1.xpose.msra.mxu0 0.0
    %370 = vmatprep.subr.mxu0 0.0
    %371 = vmatpush1.xpose.msra.mxu0 0.0
    %372 = vmatprep.subr.mxu0 0.0
    %373 = vmatpush1.xpose.msra.mxu0 0.0
    %374 = vmatprep.subr.mxu0 0.0
    %375 = vmatpush1.xpose.msra.mxu0 0.0
    %376 = vmatprep.subr.mxu0 0.0
    %377 = vmatpush1.xpose.msra.mxu0 0.0
    %378 = vmatprep.subr.mxu0 0.0
    %379 = vmatpush1.xpose.msra.mxu0 0.0
    %380 = vmatprep.subr.mxu0 0.0
    %381 = vmatpush1.xpose.msra.mxu0 0.0
    %382 = vmatprep.subr.mxu0 0.0
    %383 = vmatpush1.xpose.msra.mxu0 0.0
    %384 = vmatprep.subr.mxu0 0.0
    %385 = vmatpush1.xpose.msra.mxu0 0.0
    %386 = vmatprep.subr.mxu0 0.0
    %387 = vmatpush1.xpose.msra.mxu0 0.0
    %388 = vmatprep.subr.mxu0 0.0
    %389 = vmatpush1.xpose.msra.mxu0 0.0
    %390 = vmatprep.subr.mxu0 0.0
    %391 = vmatpush1.xpose.msra.mxu0 0.0
    %392 = vmatprep.subr.mxu0 0.0
    %393 = vmatpush1.xpose.msra.mxu0 0.0
    %394 = vmatprep.subr.mxu0 0.0
    %395 = vmatpush1.xpose.msra.mxu0 0.0
    %396 = vmatprep.subr.mxu0 0.0
    %397 = vmatpush1.xpose.msra.mxu0 0.0
    %398 = vmatprep.mubr.f32.mxu0 0.0
    %399 = vmatmul.mubr.f32.gmra.mrb[0].mxu0 %v330
    %v400 = vpop.f32.mrb[0].mxu0
    %v401 = vadd.f32 0.0, %v400
    %v402 = vpop.f32.mrb[0].mxu0
    %403 = vdwg.mxu0
    %v404 = vsel %vm240, %v401, -inf
    %405 = vmax.xlane.f32.xlu0 %v404
    %v406 = vpop.xlane.xlu0 %405
    %v407 = vsub.f32 %v401, %v406
    %v408 = vmul.f32 %v407, 1.442695
    %v409 = vpow.pop %v408
    %v410 = vsel %vm240, %v409, 0.0
    %411 = vadd.xlane.f32.xlu0 %v410
    %v412 = vpop.xlane.xlu0 %411
    %v413 = vrcp.pop %v412
    %v414 = vmul.f32 %v409, %v413
    %v416 = vsel %vm240, %v414, 0
    %418 = vmatprep.subr.mxu0 0.0
    %419 = vmatpush1.msra.mxu0 %v158
    %420 = vmatprep.subr.mxu0 0.0
    %421 = vmatpush1.msra.mxu0 0.0
    %422 = vmatprep.subr.mxu0 0.0
    %423 = vmatpush1.msra.mxu0 0.0
    %424 = vmatprep.subr.mxu0 0.0
    %425 = vmatpush1.msra.mxu0 0.0
    %426 = vmatprep.subr.mxu0 0.0
    %427 = vmatpush1.msra.mxu0 0.0
    %428 = vmatprep.subr.mxu0 0.0
    %429 = vmatpush1.msra.mxu0 0.0
    %430 = vmatprep.subr.mxu0 0.0
    %431 = vmatpush1.msra.mxu0 0.0
    %432 = vmatprep.subr.mxu0 0.0
    %433 = vmatpush1.msra.mxu0 0.0
    %434 = vmatprep.subr.mxu0 0.0
    %435 = vmatpush1.msra.mxu0 0.0
    %436 = vmatprep.subr.mxu0 0.0
    %437 = vmatpush1.msra.mxu0 0.0
    %438 = vmatprep.subr.mxu0 0.0
    %439 = vmatpush1.msra.mxu0 0.0
    %440 = vmatprep.subr.mxu0 0.0
    %441 = vmatpush1.msra.mxu0 0.0
    %442 = vmatprep.subr.mxu0 0.0
    %443 = vmatpush1.msra.mxu0 0.0
    %444 = vmatprep.subr.mxu0 0.0
    %445 = vmatpush1.msra.mxu0 0.0
    %446 = vmatprep.subr.mxu0 0.0
    %447 = vmatpush1.msra.mxu0 0.0
    %448 = vmatprep.subr.mxu0 0.0
    %449 = vmatpush1.msra.mxu0 0.0
    %450 = vmatprep.subr.mxu0 0.0
    %451 = vmatpush1.msra.mxu0 0.0
    %452 = vmatprep.subr.mxu0 0.0
    %453 = vmatpush1.msra.mxu0 0.0
    %454 = vmatprep.subr.mxu0 0.0
    %455 = vmatpush1.msra.mxu0 0.0
    %456 = vmatprep.subr.mxu0 0.0
    %457 = vmatpush1.msra.mxu0 0.0
    %458 = vmatprep.subr.mxu0 0.0
    %459 = vmatpush1.msra.mxu0 0.0
    %460 = vmatprep.subr.mxu0 0.0
    %461 = vmatpush1.msra.mxu0 0.0
    %462 = vmatprep.subr.mxu0 0.0
    %463 = vmatpush1.msra.mxu0 0.0
    %464 = vmatprep.subr.mxu0 0.0
    %465 = vmatpush1.msra.mxu0 0.0
    %466 = vmatprep.subr.mxu0 0.0
    %467 = vmatpush1.msra.mxu0 0.0
    %468 = vmatprep.subr.mxu0 0.0
    %469 = vmatpush1.msra.mxu0 0.0
    %470 = vmatprep.subr.mxu0 0.0
    %471 = vmatpush1.msra.mxu0 0.0
    %472 = vmatprep.subr.mxu0 0.0
    %473 = vmatpush1.msra.mxu0 0.0
    %474 = vmatprep.subr.mxu0 0.0
    %475 = vmatpush1.msra.mxu0 0.0
    %476 = vmatprep.subr.mxu0 0.0
    %477 = vmatpush1.msra.mxu0 0.0
    %478 = vmatprep.subr.mxu0 0.0
    %479 = vmatpush1.msra.mxu0 0.0
    %480 = vmatprep.subr.mxu0 0.0
    %481 = vmatpush1.msra.mxu0 0.0
    %482 = vmatprep.mubr.f32.mxu0 0.0
    %483 = vmatmul.mubr.f32.gmra.mrb[0].mxu0 %v416
    %v484 = vpop.f32.mrb[0].mxu0
    %v485 = vadd.f32 0.0, %v484
    %v486 = vpop.f32.mrb[0].mxu0
    %487 = vdwg.mxu0
    %v488 = vld [vmem:[%s4] sm:$0xff]
    %v489 = vld [vmem:[%s4 + $0x8] sm:$0xff]
    %490 = vrot.lane.b32.xlu0 %v160, 112
    %v491 = vpop.permute.xlu0 %490
    %492 = vrot.lane.b32.xlu0 %v150, 48
    %v493 = vpop.permute.xlu0 %492
    %v494 = vsel %vm164, %v491, 0
    %v496 = vsel %vm164, %v493, 0
    %498 = vmatprep.subr.mxu0 0.0
    %499 = vmatpush1.xpose.msra.mxu0 %v496
    %500 = vmatprep.subr.mxu0 0.0
    %501 = vmatpush1.xpose.msra.mxu0 0.0
    %502 = vmatprep.subr.mxu0 0.0
    %503 = vmatpush1.xpose.msra.mxu0 0.0
    %504 = vmatprep.subr.mxu0 0.0
    %505 = vmatpush1.xpose.msra.mxu0 0.0
    %506 = vmatprep.subr.mxu0 0.0
    %507 = vmatpush1.xpose.msra.mxu0 0.0
    %508 = vmatprep.subr.mxu0 0.0
    %509 = vmatpush1.xpose.msra.mxu0 0.0
    %510 = vmatprep.subr.mxu0 0.0
    %511 = vmatpush1.xpose.msra.mxu0 0.0
    %512 = vmatprep.subr.mxu0 0.0
    %513 = vmatpush1.xpose.msra.mxu0 0.0
    %514 = vmatprep.subr.mxu0 0.0
    %515 = vmatpush1.xpose.msra.mxu0 0.0
    %516 = vmatprep.subr.mxu0 0.0
    %517 = vmatpush1.xpose.msra.mxu0 0.0
    %518 = vmatprep.subr.mxu0 0.0
    %519 = vmatpush1.xpose.msra.mxu0 0.0
    %520 = vmatprep.subr.mxu0 0.0
    %521 = vmatpush1.xpose.msra.mxu0 0.0
    %522 = vmatprep.subr.mxu0 0.0
    %523 = vmatpush1.xpose.msra.mxu0 0.0
    %524 = vmatprep.subr.mxu0 0.0
    %525 = vmatpush1.xpose.msra.mxu0 0.0
    %526 = vmatprep.subr.mxu0 0.0
    %527 = vmatpush1.xpose.msra.mxu0 0.0
    %528 = vmatprep.subr.mxu0 0.0
    %529 = vmatpush1.xpose.msra.mxu0 0.0
    %530 = vmatprep.subr.mxu0 0.0
    %531 = vmatpush1.xpose.msra.mxu0 0.0
    %532 = vmatprep.subr.mxu0 0.0
    %533 = vmatpush1.xpose.msra.mxu0 0.0
    %534 = vmatprep.subr.mxu0 0.0
    %535 = vmatpush1.xpose.msra.mxu0 0.0
    %536 = vmatprep.subr.mxu0 0.0
    %537 = vmatpush1.xpose.msra.mxu0 0.0
    %538 = vmatprep.subr.mxu0 0.0
    %539 = vmatpush1.xpose.msra.mxu0 0.0
    %540 = vmatprep.subr.mxu0 0.0
    %541 = vmatpush1.xpose.msra.mxu0 0.0
    %542 = vmatprep.subr.mxu0 0.0
    %543 = vmatpush1.xpose.msra.mxu0 0.0
    %544 = vmatprep.subr.mxu0 0.0
    %545 = vmatpush1.xpose.msra.mxu0 0.0
    %546 = vmatprep.subr.mxu0 0.0
    %547 = vmatpush1.xpose.msra.mxu0 0.0
    %548 = vmatprep.subr.mxu0 0.0
    %549 = vmatpush1.xpose.msra.mxu0 0.0
    %550 = vmatprep.subr.mxu0 0.0
    %551 = vmatpush1.xpose.msra.mxu0 0.0
    %552 = vmatprep.subr.mxu0 0.0
    %553 = vmatpush1.xpose.msra.mxu0 0.0
    %554 = vmatprep.subr.mxu0 0.0
    %555 = vmatpush1.xpose.msra.mxu0 0.0
    %556 = vmatprep.subr.mxu0 0.0
    %557 = vmatpush1.xpose.msra.mxu0 0.0
    %558 = vmatprep.subr.mxu0 0.0
    %559 = vmatpush1.xpose.msra.mxu0 0.0
    %560 = vmatprep.subr.mxu0 0.0
    %561 = vmatpush1.xpose.msra.mxu0 0.0
    %562 = vmatprep.mubr.f32.mxu0 0.0
    %563 = vmatmul.mubr.f32.gmra.mrb[0].mxu0 %v494
    %v564 = vpop.f32.mrb[0].mxu0
    %v565 = vadd.f32 0.0, %v564
    %v566 = vpop.f32.mrb[0].mxu0
    %567 = vdwg.mxu0
    %v568 = vsel %vm240, %v565, -inf
    %569 = vmax.xlane.f32.xlu0 %v568
    %v570 = vpop.xlane.xlu0 %569
    %v571 = vsub.f32 %v565, %v570
    %v572 = vmul.f32 %v571, 1.442695
    %v573 = vpow.pop %v572
    %v574 = vsel %vm240, %v573, 0.0
    %575 = vadd.xlane.f32.xlu0 %v574
    %v576 = vpop.xlane.xlu0 %575
    %v577 = vrcp.pop %v576
    %v578 = vmul.f32 %v573, %v577
    %580 = vrot.lane.b32.xlu0 %v152, 112
    %v581 = vpop.permute.xlu0 %580
    %v584 = vsel %vm240, %v578, 0
    %586 = vmatprep.subr.mxu0 0.0
    %587 = vmatpush1.msra.mxu0 %v581
    %588 = vmatprep.subr.mxu0 0.0
    %589 = vmatpush1.msra.mxu0 0.0
    %590 = vmatprep.subr.mxu0 0.0
    %591 = vmatpush1.msra.mxu0 0.0
    %592 = vmatprep.subr.mxu0 0.0
    %593 = vmatpush1.msra.mxu0 0.0
    %594 = vmatprep.subr.mxu0 0.0
    %595 = vmatpush1.msra.mxu0 0.0
    %596 = vmatprep.subr.mxu0 0.0
    %597 = vmatpush1.msra.mxu0 0.0
    %598 = vmatprep.subr.mxu0 0.0
    %599 = vmatpush1.msra.mxu0 0.0
    %600 = vmatprep.subr.mxu0 0.0
    %601 = vmatpush1.msra.mxu0 0.0
    %602 = vmatprep.subr.mxu0 0.0
    %603 = vmatpush1.msra.mxu0 0.0
    %604 = vmatprep.subr.mxu0 0.0
    %605 = vmatpush1.msra.mxu0 0.0
    %606 = vmatprep.subr.mxu0 0.0
    %607 = vmatpush1.msra.mxu0 0.0
    %608 = vmatprep.subr.mxu0 0.0
    %609 = vmatpush1.msra.mxu0 0.0
    %610 = vmatprep.subr.mxu0 0.0
    %611 = vmatpush1.msra.mxu0 0.0
    %612 = vmatprep.subr.mxu0 0.0
    %613 = vmatpush1.msra.mxu0 0.0
    %614 = vmatprep.subr.mxu0 0.0
    %615 = vmatpush1.msra.mxu0 0.0
    %616 = vmatprep.subr.mxu0 0.0
    %617 = vmatpush1.msra.mxu0 0.0
    %618 = vmatprep.subr.mxu0 0.0
    %619 = vmatpush1.msra.mxu0 0.0
    %620 = vmatprep.subr.mxu0 0.0
    %621 = vmatpush1.msra.mxu0 0.0
    %622 = vmatprep.subr.mxu0 0.0
    %623 = vmatpush1.msra.mxu0 0.0
    %624 = vmatprep.subr.mxu0 0.0
    %625 = vmatpush1.msra.mxu0 0.0
    %626 = vmatprep.subr.mxu0 0.0
    %627 = vmatpush1.msra.mxu0 0.0
    %628 = vmatprep.subr.mxu0 0.0
    %629 = vmatpush1.msra.mxu0 0.0
    %630 = vmatprep.subr.mxu0 0.0
    %631 = vmatpush1.msra.mxu0 0.0
    %632 = vmatprep.subr.mxu0 0.0
    %633 = vmatpush1.msra.mxu0 0.0
    %634 = vmatprep.subr.mxu0 0.0
    %635 = vmatpush1.msra.mxu0 0.0
    %636 = vmatprep.subr.mxu0 0.0
    %637 = vmatpush1.msra.mxu0 0.0
    %638 = vmatprep.subr.mxu0 0.0
    %639 = vmatpush1.msra.mxu0 0.0
    %640 = vmatprep.subr.mxu0 0.0
    %641 = vmatpush1.msra.mxu0 0.0
    %642 = vmatprep.subr.mxu0 0.0
    %643 = vmatpush1.msra.mxu0 0.0
    %644 = vmatprep.subr.mxu0 0.0
    %645 = vmatpush1.msra.mxu0 0.0
    %646 = vmatprep.subr.mxu0 0.0
    %647 = vmatpush1.msra.mxu0 0.0
    %648 = vmatprep.subr.mxu0 0.0
    %649 = vmatpush1.msra.mxu0 0.0
    %650 = vmatprep.mubr.f32.mxu0 0.0
    %651 = vmatmul.mubr.f32.gmra.mrb[0].mxu0 %v584
    %v652 = vpop.f32.mrb[0].mxu0
    %v653 = vadd.f32 0.0, %v652
    %v654 = vpop.f32.mrb[0].mxu0
    %655 = vdwg.mxu0
    %656 = vrot.lane.b32.xlu0 %v325, 112
    %v657 = vpop.permute.xlu0 %656
    %658 = vrot.lane.b32.xlu0 %v156, 48
    %v659 = vpop.permute.xlu0 %658
    %v660 = vsel %vm164, %v657, 0
    %v662 = vsel %vm164, %v659, 0
    %664 = vmatprep.subr.mxu0 0.0
    %665 = vmatpush1.xpose.msra.mxu0 %v662
    %666 = vmatprep.subr.mxu0 0.0
    %667 = vmatpush1.xpose.msra.mxu0 0.0
    %668 = vmatprep.subr.mxu0 0.0
    %669 = vmatpush1.xpose.msra.mxu0 0.0
    %670 = vmatprep.subr.mxu0 0.0
    %671 = vmatpush1.xpose.msra.mxu0 0.0
    %672 = vmatprep.subr.mxu0 0.0
    %673 = vmatpush1.xpose.msra.mxu0 0.0
    %674 = vmatprep.subr.mxu0 0.0
    %675 = vmatpush1.xpose.msra.mxu0 0.0
    %676 = vmatprep.subr.mxu0 0.0
    %677 = vmatpush1.xpose.msra.mxu0 0.0
    %678 = vmatprep.subr.mxu0 0.0
    %679 = vmatpush1.xpose.msra.mxu0 0.0
    %680 = vmatprep.subr.mxu0 0.0
    %681 = vmatpush1.xpose.msra.mxu0 0.0
    %682 = vmatprep.subr.mxu0 0.0
    %683 = vmatpush1.xpose.msra.mxu0 0.0
    %684 = vmatprep.subr.mxu0 0.0
    %685 = vmatpush1.xpose.msra.mxu0 0.0
    %686 = vmatprep.subr.mxu0 0.0
    %687 = vmatpush1.xpose.msra.mxu0 0.0
    %688 = vmatprep.subr.mxu0 0.0
    %689 = vmatpush1.xpose.msra.mxu0 0.0
    %690 = vmatprep.subr.mxu0 0.0
    %691 = vmatpush1.xpose.msra.mxu0 0.0
    %692 = vmatprep.subr.mxu0 0.0
    %693 = vmatpush1.xpose.msra.mxu0 0.0
    %694 = vmatprep.subr.mxu0 0.0
    %695 = vmatpush1.xpose.msra.mxu0 0.0
    %696 = vmatprep.subr.mxu0 0.0
    %697 = vmatpush1.xpose.msra.mxu0 0.0
    %698 = vmatprep.subr.mxu0 0.0
    %699 = vmatpush1.xpose.msra.mxu0 0.0
    %700 = vmatprep.subr.mxu0 0.0
    %701 = vmatpush1.xpose.msra.mxu0 0.0
    %702 = vmatprep.subr.mxu0 0.0
    %703 = vmatpush1.xpose.msra.mxu0 0.0
    %704 = vmatprep.subr.mxu0 0.0
    %705 = vmatpush1.xpose.msra.mxu0 0.0
    %706 = vmatprep.subr.mxu0 0.0
    %707 = vmatpush1.xpose.msra.mxu0 0.0
    %708 = vmatprep.subr.mxu0 0.0
    %709 = vmatpush1.xpose.msra.mxu0 0.0
    %710 = vmatprep.subr.mxu0 0.0
    %711 = vmatpush1.xpose.msra.mxu0 0.0
    %712 = vmatprep.subr.mxu0 0.0
    %713 = vmatpush1.xpose.msra.mxu0 0.0
    %714 = vmatprep.subr.mxu0 0.0
    %715 = vmatpush1.xpose.msra.mxu0 0.0
    %716 = vmatprep.subr.mxu0 0.0
    %717 = vmatpush1.xpose.msra.mxu0 0.0
    %718 = vmatprep.subr.mxu0 0.0
    %719 = vmatpush1.xpose.msra.mxu0 0.0
    %720 = vmatprep.subr.mxu0 0.0
    %721 = vmatpush1.xpose.msra.mxu0 0.0
    %722 = vmatprep.subr.mxu0 0.0
    %723 = vmatpush1.xpose.msra.mxu0 0.0
    %724 = vmatprep.subr.mxu0 0.0
    %725 = vmatpush1.xpose.msra.mxu0 0.0
    %726 = vmatprep.subr.mxu0 0.0
    %727 = vmatpush1.xpose.msra.mxu0 0.0
    %728 = vmatprep.mubr.f32.mxu0 0.0
    %729 = vmatmul.mubr.f32.gmra.mrb[0].mxu0 %v660
    %v730 = vpop.f32.mrb[0].mxu0
    %v731 = vadd.f32 0.0, %v730
    %v732 = vpop.f32.mrb[0].mxu0
    %733 = vdwg.mxu0
    %v734 = vsel %vm240, %v731, -inf
    %735 = vmax.xlane.f32.xlu0 %v734
    %v736 = vpop.xlane.xlu0 %735
    %v737 = vsub.f32 %v731, %v736
    %v738 = vmul.f32 %v737, 1.442695
    %v739 = vpow.pop %v738
    %v740 = vsel %vm240, %v739, 0.0
    %741 = vadd.xlane.f32.xlu0 %v740
    %v742 = vpop.xlane.xlu0 %741
    %v743 = vrcp.pop %v742
    %v744 = vmul.f32 %v739, %v743
    %746 = vrot.lane.b32.xlu0 %v158, 112
    %v747 = vpop.permute.xlu0 %746
    %v750 = vsel %vm240, %v744, 0
    %752 = vmatprep.subr.mxu0 0.0
    %753 = vmatpush1.msra.mxu0 %v747
    %754 = vmatprep.subr.mxu0 0.0
    %755 = vmatpush1.msra.mxu0 0.0
    %756 = vmatprep.subr.mxu0 0.0
    %757 = vmatpush1.msra.mxu0 0.0
    %758 = vmatprep.subr.mxu0 0.0
    %759 = vmatpush1.msra.mxu0 0.0
    %760 = vmatprep.subr.mxu0 0.0
    %761 = vmatpush1.msra.mxu0 0.0
    %762 = vmatprep.subr.mxu0 0.0
    %763 = vmatpush1.msra.mxu0 0.0
    %764 = vmatprep.subr.mxu0 0.0
    %765 = vmatpush1.msra.mxu0 0.0
    %766 = vmatprep.subr.mxu0 0.0
    %767 = vmatpush1.msra.mxu0 0.0
    %768 = vmatprep.subr.mxu0 0.0
    %769 = vmatpush1.msra.mxu0 0.0
    %770 = vmatprep.subr.mxu0 0.0
    %771 = vmatpush1.msra.mxu0 0.0
    %772 = vmatprep.subr.mxu0 0.0
    %773 = vmatpush1.msra.mxu0 0.0
    %774 = vmatprep.subr.mxu0 0.0
    %775 = vmatpush1.msra.mxu0 0.0
    %776 = vmatprep.subr.mxu0 0.0
    %777 = vmatpush1.msra.mxu0 0.0
    %778 = vmatprep.subr.mxu0 0.0
    %779 = vmatpush1.msra.mxu0 0.0
    %780 = vmatprep.subr.mxu0 0.0
    %781 = vmatpush1.msra.mxu0 0.0
    %782 = vmatprep.subr.mxu0 0.0
    %783 = vmatpush1.msra.mxu0 0.0
    %784 = vmatprep.subr.mxu0 0.0
    %785 = vmatpush1.msra.mxu0 0.0
    %786 = vmatprep.subr.mxu0 0.0
    %787 = vmatpush1.msra.mxu0 0.0
    %788 = vmatprep.subr.mxu0 0.0
    %789 = vmatpush1.msra.mxu0 0.0
    %790 = vmatprep.subr.mxu0 0.0
    %791 = vmatpush1.msra.mxu0 0.0
    %792 = vmatprep.subr.mxu0 0.0
    %793 = vmatpush1.msra.mxu0 0.0
    %794 = vmatprep.subr.mxu0 0.0
    %795 = vmatpush1.msra.mxu0 0.0
    %796 = vmatprep.subr.mxu0 0.0
    %797 = vmatpush1.msra.mxu0 0.0
    %798 = vmatprep.subr.mxu0 0.0
    %799 = vmatpush1.msra.mxu0 0.0
    %800 = vmatprep.subr.mxu0 0.0
    %801 = vmatpush1.msra.mxu0 0.0
    %802 = vmatprep.subr.mxu0 0.0
    %803 = vmatpush1.msra.mxu0 0.0
    %804 = vmatprep.subr.mxu0 0.0
    %805 = vmatpush1.msra.mxu0 0.0
    %806 = vmatprep.subr.mxu0 0.0
    %807 = vmatpush1.msra.mxu0 0.0
    %808 = vmatprep.subr.mxu0 0.0
    %809 = vmatpush1.msra.mxu0 0.0
    %810 = vmatprep.subr.mxu0 0.0
    %811 = vmatpush1.msra.mxu0 0.0
    %812 = vmatprep.subr.mxu0 0.0
    %813 = vmatpush1.msra.mxu0 0.0
    %814 = vmatprep.subr.mxu0 0.0
    %815 = vmatpush1.msra.mxu0 0.0
    %816 = vmatprep.mubr.f32.mxu0 0.0
    %817 = vmatmul.mubr.f32.gmra.mrb[0].mxu0 %v750
    %v818 = vpop.f32.mrb[0].mxu0
    %v819 = vadd.f32 0.0, %v818
    %v820 = vpop.f32.mrb[0].mxu0
    %821 = vdwg.mxu0
    %v822 = vld [vmem:[%s4 + $0x10] sm:$0xff]
    %v823 = vld [vmem:[%s4 + $0x18] sm:$0xff]
    %v825 = vsel %vm164, %v653, 0
    %v828 = vsel %vm164, %v819, 0
    %830 = vmatprep.subr.mxu0 0.0
    %831 = vmatpush1.msra.mxu0 %v822
    %832 = vmatprep.subr.mxu0 0.0
    %833 = vmatpush1.msra.mxu0 %v823
    %834 = vmatprep.subr.mxu0 0.0
    %835 = vmatpush1.msra.mxu0 0.0
    %836 = vmatprep.subr.mxu0 0.0
    %837 = vmatpush1.msra.mxu0 0.0
    %838 = vmatprep.subr.mxu0 0.0
    %839 = vmatpush1.msra.mxu0 0.0
    %840 = vmatprep.subr.mxu0 0.0
    %841 = vmatpush1.msra.mxu0 0.0
    %842 = vmatprep.subr.mxu0 0.0
    %843 = vmatpush1.msra.mxu0 0.0
    %844 = vmatprep.subr.mxu0 0.0
    %845 = vmatpush1.msra.mxu0 0.0
    %846 = vmatprep.subr.mxu0 0.0
    %847 = vmatpush1.msra.mxu0 0.0
    %848 = vmatprep.subr.mxu0 0.0
    %849 = vmatpush1.msra.mxu0 0.0
    %850 = vmatprep.subr.mxu0 0.0
    %851 = vmatpush1.msra.mxu0 0.0
    %852 = vmatprep.subr.mxu0 0.0
    %853 = vmatpush1.msra.mxu0 0.0
    %854 = vmatprep.subr.mxu0 0.0
    %855 = vmatpush1.msra.mxu0 0.0
    %856 = vmatprep.subr.mxu0 0.0
    %857 = vmatpush1.msra.mxu0 0.0
    %858 = vmatprep.subr.mxu0 0.0
    %859 = vmatpush1.msra.mxu0 0.0
    %860 = vmatprep.subr.mxu0 0.0
    %861 = vmatpush1.msra.mxu0 0.0
    %862 = vmatprep.subr.mxu0 0.0
    %863 = vmatpush1.msra.mxu0 0.0
    %864 = vmatprep.subr.mxu0 0.0
    %865 = vmatpush1.msra.mxu0 0.0
    %866 = vmatprep.subr.mxu0 0.0
    %867 = vmatpush1.msra.mxu0 0.0
    %868 = vmatprep.subr.mxu0 0.0
    %869 = vmatpush1.msra.mxu0 0.0
    %870 = vmatprep.subr.mxu0 0.0
    %871 = vmatpush1.msra.mxu0 0.0
    %872 = vmatprep.subr.mxu0 0.0
    %873 = vmatpush1.msra.mxu0 0.0
    %874 = vmatprep.subr.mxu0 0.0
    %875 = vmatpush1.msra.mxu0 0.0
    %876 = vmatprep.subr.mxu0 0.0
    %877 = vmatpush1.msra.mxu0 0.0
    %878 = vmatprep.subr.mxu0 0.0
    %879 = vmatpush1.msra.mxu0 0.0
    %880 = vmatprep.subr.mxu0 0.0
    %881 = vmatpush1.msra.mxu0 0.0
    %882 = vmatprep.subr.mxu0 0.0
    %883 = vmatpush1.msra.mxu0 0.0
    %884 = vmatprep.subr.mxu0 0.0
    %885 = vmatpush1.msra.mxu0 0.0
    %886 = vmatprep.subr.mxu0 0.0
    %887 = vmatpush1.msra.mxu0 0.0
    %888 = vmatprep.subr.mxu0 0.0
    %889 = vmatpush1.msra.mxu0 0.0
    %890 = vmatprep.subr.mxu0 0.0
    %891 = vmatpush1.msra.mxu0 0.0
    %892 = vmatprep.subr.mxu0 0.0
    %893 = vmatpush1.msra.mxu0 0.0
    %894 = vmatprep.mubr.f32.mxu0 0.0
    %895 = vmatmul.mubr.f32.gmra.mrb[0].mxu0 %v825
    %v896 = vpop.f32.mrb[0].mxu0
    %v897 = vadd.f32 0.0, %v896
    %v898 = vpop.f32.mrb[0].mxu0
    %899 = vmatprep.mubr.f32.mxu0 0.0
    %900 = vmatmul.mubr.f32.gmra.mrb[0].mxu0 %v828
    %v901 = vpop.f32.mrb[0].mxu0
    %v902 = vadd.f32 0.0, %v901
    %v903 = vpop.f32.mrb[0].mxu0
    %904 = vdwg.mxu0
    %v906 = vsel %vm164, %v322, 0
    %v909 = vsel %vm164, %v485, 0
    %911 = vmatprep.subr.mxu0 0.0
    %912 = vmatpush1.msra.mxu0 %v488
    %913 = vmatprep.subr.mxu0 0.0
    %914 = vmatpush1.msra.mxu0 %v489
    %915 = vmatprep.subr.mxu0 0.0
    %916 = vmatpush1.msra.mxu0 0.0
    %917 = vmatprep.subr.mxu0 0.0
    %918 = vmatpush1.msra.mxu0 0.0
    %919 = vmatprep.subr.mxu0 0.0
    %920 = vmatpush1.msra.mxu0 0.0
    %921 = vmatprep.subr.mxu0 0.0
    %922 = vmatpush1.msra.mxu0 0.0
    %923 = vmatprep.subr.mxu0 0.0
    %924 = vmatpush1.msra.mxu0 0.0
    %925 = vmatprep.subr.mxu0 0.0
    %926 = vmatpush1.msra.mxu0 0.0
    %927 = vmatprep.subr.mxu0 0.0
    %928 = vmatpush1.msra.mxu0 0.0
    %929 = vmatprep.subr.mxu0 0.0
    %930 = vmatpush1.msra.mxu0 0.0
    %931 = vmatprep.subr.mxu0 0.0
    %932 = vmatpush1.msra.mxu0 0.0
    %933 = vmatprep.subr.mxu0 0.0
    %934 = vmatpush1.msra.mxu0 0.0
    %935 = vmatprep.subr.mxu0 0.0
    %936 = vmatpush1.msra.mxu0 0.0
    %937 = vmatprep.subr.mxu0 0.0
    %938 = vmatpush1.msra.mxu0 0.0
    %939 = vmatprep.subr.mxu0 0.0
    %940 = vmatpush1.msra.mxu0 0.0
    %941 = vmatprep.subr.mxu0 0.0
    %942 = vmatpush1.msra.mxu0 0.0
    %943 = vmatprep.subr.mxu0 0.0
    %944 = vmatpush1.msra.mxu0 0.0
    %945 = vmatprep.subr.mxu0 0.0
    %946 = vmatpush1.msra.mxu0 0.0
    %947 = vmatprep.subr.mxu0 0.0
    %948 = vmatpush1.msra.mxu0 0.0
    %949 = vmatprep.subr.mxu0 0.0
    %950 = vmatpush1.msra.mxu0 0.0
    %951 = vmatprep.subr.mxu0 0.0
    %952 = vmatpush1.msra.mxu0 0.0
    %953 = vmatprep.subr.mxu0 0.0
    %954 = vmatpush1.msra.mxu0 0.0
    %955 = vmatprep.subr.mxu0 0.0
    %956 = vmatpush1.msra.mxu0 0.0
    %957 = vmatprep.subr.mxu0 0.0
    %958 = vmatpush1.msra.mxu0 0.0
    %959 = vmatprep.subr.mxu0 0.0
    %960 = vmatpush1.msra.mxu0 0.0
    %961 = vmatprep.subr.mxu0 0.0
    %962 = vmatpush1.msra.mxu0 0.0
    %963 = vmatprep.subr.mxu0 0.0
    %964 = vmatpush1.msra.mxu0 0.0
    %965 = vmatprep.subr.mxu0 0.0
    %966 = vmatpush1.msra.mxu0 0.0
    %967 = vmatprep.subr.mxu0 0.0
    %968 = vmatpush1.msra.mxu0 0.0
    %969 = vmatprep.subr.mxu0 0.0
    %970 = vmatpush1.msra.mxu0 0.0
    %971 = vmatprep.subr.mxu0 0.0
    %972 = vmatpush1.msra.mxu0 0.0
    %973 = vmatprep.subr.mxu0 0.0
    %974 = vmatpush1.msra.mxu0 0.0
    %975 = vmatprep.mubr.f32.mxu0 0.0
    %976 = vmatmul.mubr.f32.gmra.mrb[0].mxu0 %v906
    %v977 = vpop.f32.mrb[0].mxu0
    %v978 = vadd.f32 %v897, %v977
    %v979 = vpop.f32.mrb[0].mxu0
    %980 = vmatprep.mubr.f32.mxu0 0.0
    %981 = vmatmul.mubr.f32.gmra.mrb[0].mxu0 %v909
    %v982 = vpop.f32.mrb[0].mxu0
    %v983 = vadd.f32 %v902, %v982
    %v984 = vpop.f32.mrb[0].mxu0
    %985 = vdwg.mxu0
    %986 = vrot.lane.b32.xlu0 %v160, 96
    %v987 = vpop.permute.xlu0 %986
    %988 = vrot.lane.b32.xlu0 %v150, 32
    %v989 = vpop.permute.xlu0 %988
    %v990 = vsel %vm164, %v987, 0
    %v992 = vsel %vm164, %v989, 0
    %994 = vmatprep.subr.mxu0 0.0
    %995 = vmatpush1.xpose.msra.mxu0 %v992
    %996 = vmatprep.subr.mxu0 0.0
    %997 = vmatpush1.xpose.msra.mxu0 0.0
    %998 = vmatprep.subr.mxu0 0.0
    %999 = vmatpush1.xpose.msra.mxu0 0.0
    %1000 = vmatprep.subr.mxu0 0.0
    %1001 = vmatpush1.xpose.msra.mxu0 0.0
    %1002 = vmatprep.subr.mxu0 0.0
    %1003 = vmatpush1.xpose.msra.mxu0 0.0
    %1004 = vmatprep.subr.mxu0 0.0
    %1005 = vmatpush1.xpose.msra.mxu0 0.0
    %1006 = vmatprep.subr.mxu0 0.0
    %1007 = vmatpush1.xpose.msra.mxu0 0.0
    %1008 = vmatprep.subr.mxu0 0.0
    %1009 = vmatpush1.xpose.msra.mxu0 0.0
    %1010 = vmatprep.subr.mxu0 0.0
    %1011 = vmatpush1.xpose.msra.mxu0 0.0
    %1012 = vmatprep.subr.mxu0 0.0
    %1013 = vmatpush1.xpose.msra.mxu0 0.0
    %1014 = vmatprep.subr.mxu0 0.0
    %1015 = vmatpush1.xpose.msra.mxu0 0.0
    %1016 = vmatprep.subr.mxu0 0.0
    %1017 = vmatpush1.xpose.msra.mxu0 0.0
    %1018 = vmatprep.subr.mxu0 0.0
    %1019 = vmatpush1.xpose.msra.mxu0 0.0
    %1020 = vmatprep.subr.mxu0 0.0
    %1021 = vmatpush1.xpose.msra.mxu0 0.0
    %1022 = vmatprep.subr.mxu0 0.0
    %1023 = vmatpush1.xpose.msra.mxu0 0.0
    %1024 = vmatprep.subr.mxu0 0.0
    %1025 = vmatpush1.xpose.msra.mxu0 0.0
    %1026 = vmatprep.subr.mxu0 0.0
    %1027 = vmatpush1.xpose.msra.mxu0 0.0
    %1028 = vmatprep.subr.mxu0 0.0
    %1029 = vmatpush1.xpose.msra.mxu0 0.0
    %1030 = vmatprep.subr.mxu0 0.0
    %1031 = vmatpush1.xpose.msra.mxu0 0.0
    %1032 = vmatprep.subr.mxu0 0.0
    %1033 = vmatpush1.xpose.msra.mxu0 0.0
    %1034 = vmatprep.subr.mxu0 0.0
    %1035 = vmatpush1.xpose.msra.mxu0 0.0
    %1036 = vmatprep.subr.mxu0 0.0
    %1037 = vmatpush1.xpose.msra.mxu0 0.0
    %1038 = vmatprep.subr.mxu0 0.0
    %1039 = vmatpush1.xpose.msra.mxu0 0.0
    %1040 = vmatprep.subr.mxu0 0.0
    %1041 = vmatpush1.xpose.msra.mxu0 0.0
    %1042 = vmatprep.subr.mxu0 0.0
    %1043 = vmatpush1.xpose.msra.mxu0 0.0
    %1044 = vmatprep.subr.mxu0 0.0
    %1045 = vmatpush1.xpose.msra.mxu0 0.0
    %1046 = vmatprep.subr.mxu0 0.0
    %1047 = vmatpush1.xpose.msra.mxu0 0.0
    %1048 = vmatprep.subr.mxu0 0.0
    %1049 = vmatpush1.xpose.msra.mxu0 0.0
    %1050 = vmatprep.subr.mxu0 0.0
    %1051 = vmatpush1.xpose.msra.mxu0 0.0
    %1052 = vmatprep.subr.mxu0 0.0
    %1053 = vmatpush1.xpose.msra.mxu0 0.0
    %1054 = vmatprep.subr.mxu0 0.0
    %1055 = vmatpush1.xpose.msra.mxu0 0.0
    %1056 = vmatprep.subr.mxu0 0.0
    %1057 = vmatpush1.xpose.msra.mxu0 0.0
    %1058 = vmatprep.mubr.f32.mxu0 0.0
    %1059 = vmatmul.mubr.f32.gmra.mrb[0].mxu0 %v990
    %v1060 = vpop.f32.mrb[0].mxu0
    %v1061 = vadd.f32 0.0, %v1060
    %v1062 = vpop.f32.mrb[0].mxu0
    %1063 = vdwg.mxu0
    %v1064 = vsel %vm240, %v1061, -inf
    %1065 = vmax.xlane.f32.xlu0 %v1064
    %v1066 = vpop.xlane.xlu0 %1065
    %v1067 = vsub.f32 %v1061, %v1066
    %v1068 = vmul.f32 %v1067, 1.442695
    %v1069 = vpow.pop %v1068
    %v1070 = vsel %vm240, %v1069, 0.0
    %1071 = vadd.xlane.f32.xlu0 %v1070
    %v1072 = vpop.xlane.xlu0 %1071
    %v1073 = vrcp.pop %v1072
    %v1074 = vmul.f32 %v1069, %v1073
    %1075 = vrot.lane.b32.xlu0 %v152, 96
    %v1076 = vpop.permute.xlu0 %1075
    %v1079 = vsel %vm240, %v1074, 0
    %1081 = vmatprep.subr.mxu0 0.0
    %1082 = vmatpush1.msra.mxu0 %v1076
    %1083 = vmatprep.subr.mxu0 0.0
    %1084 = vmatpush1.msra.mxu0 0.0
    %1085 = vmatprep.subr.mxu0 0.0
    %1086 = vmatpush1.msra.mxu0 0.0
    %1087 = vmatprep.subr.mxu0 0.0
    %1088 = vmatpush1.msra.mxu0 0.0
    %1089 = vmatprep.subr.mxu0 0.0
    %1090 = vmatpush1.msra.mxu0 0.0
    %1091 = vmatprep.subr.mxu0 0.0
    %1092 = vmatpush1.msra.mxu0 0.0
    %1093 = vmatprep.subr.mxu0 0.0
    %1094 = vmatpush1.msra.mxu0 0.0
    %1095 = vmatprep.subr.mxu0 0.0
    %1096 = vmatpush1.msra.mxu0 0.0
    %1097 = vmatprep.subr.mxu0 0.0
    %1098 = vmatpush1.msra.mxu0 0.0
    %1099 = vmatprep.subr.mxu0 0.0
    %1100 = vmatpush1.msra.mxu0 0.0
    %1101 = vmatprep.subr.mxu0 0.0
    %1102 = vmatpush1.msra.mxu0 0.0
    %1103 = vmatprep.subr.mxu0 0.0
    %1104 = vmatpush1.msra.mxu0 0.0
    %1105 = vmatprep.subr.mxu0 0.0
    %1106 = vmatpush1.msra.mxu0 0.0
    %1107 = vmatprep.subr.mxu0 0.0
    %1108 = vmatpush1.msra.mxu0 0.0
    %1109 = vmatprep.subr.mxu0 0.0
    %1110 = vmatpush1.msra.mxu0 0.0
    %1111 = vmatprep.subr.mxu0 0.0
    %1112 = vmatpush1.msra.mxu0 0.0
    %1113 = vmatprep.subr.mxu0 0.0
    %1114 = vmatpush1.msra.mxu0 0.0
    %1115 = vmatprep.subr.mxu0 0.0
    %1116 = vmatpush1.msra.mxu0 0.0
    %1117 = vmatprep.subr.mxu0 0.0
    %1118 = vmatpush1.msra.mxu0 0.0
    %1119 = vmatprep.subr.mxu0 0.0
    %1120 = vmatpush1.msra.mxu0 0.0
    %1121 = vmatprep.subr.mxu0 0.0
    %1122 = vmatpush1.msra.mxu0 0.0
    %1123 = vmatprep.subr.mxu0 0.0
    %1124 = vmatpush1.msra.mxu0 0.0
    %1125 = vmatprep.subr.mxu0 0.0
    %1126 = vmatpush1.msra.mxu0 0.0
    %1127 = vmatprep.subr.mxu0 0.0
    %1128 = vmatpush1.msra.mxu0 0.0
    %1129 = vmatprep.subr.mxu0 0.0
    %1130 = vmatpush1.msra.mxu0 0.0
    %1131 = vmatprep.subr.mxu0 0.0
    %1132 = vmatpush1.msra.mxu0 0.0
    %1133 = vmatprep.subr.mxu0 0.0
    %1134 = vmatpush1.msra.mxu0 0.0
    %1135 = vmatprep.subr.mxu0 0.0
    %1136 = vmatpush1.msra.mxu0 0.0
    %1137 = vmatprep.subr.mxu0 0.0
    %1138 = vmatpush1.msra.mxu0 0.0
    %1139 = vmatprep.subr.mxu0 0.0
    %1140 = vmatpush1.msra.mxu0 0.0
    %1141 = vmatprep.subr.mxu0 0.0
    %1142 = vmatpush1.msra.mxu0 0.0
    %1143 = vmatprep.subr.mxu0 0.0
    %1144 = vmatpush1.msra.mxu0 0.0
    %1145 = vmatprep.mubr.f32.mxu0 0.0
    %1146 = vmatmul.mubr.f32.gmra.mrb[0].mxu0 %v1079
    %v1147 = vpop.f32.mrb[0].mxu0
    %v1148 = vadd.f32 0.0, %v1147
    %v1149 = vpop.f32.mrb[0].mxu0
    %1150 = vdwg.mxu0
    %1151 = vrot.lane.b32.xlu0 %v325, 96
    %v1152 = vpop.permute.xlu0 %1151
    %1153 = vrot.lane.b32.xlu0 %v156, 32
    %v1154 = vpop.permute.xlu0 %1153
    %v1155 = vsel %vm164, %v1152, 0
    %v1157 = vsel %vm164, %v1154, 0
    %1159 = vmatprep.subr.mxu0 0.0
    %1160 = vmatpush1.xpose.msra.mxu0 %v1157
    %1161 = vmatprep.subr.mxu0 0.0
    %1162 = vmatpush1.xpose.msra.mxu0 0.0
    %1163 = vmatprep.subr.mxu0 0.0
    %1164 = vmatpush1.xpose.msra.mxu0 0.0
    %1165 = vmatprep.subr.mxu0 0.0
    %1166 = vmatpush1.xpose.msra.mxu0 0.0
    %1167 = vmatprep.subr.mxu0 0.0
    %1168 = vmatpush1.xpose.msra.mxu0 0.0
    %1169 = vmatprep.subr.mxu0 0.0
    %1170 = vmatpush1.xpose.msra.mxu0 0.0
    %1171 = vmatprep.subr.mxu0 0.0
    %1172 = vmatpush1.xpose.msra.mxu0 0.0
    %1173 = vmatprep.subr.mxu0 0.0
    %1174 = vmatpush1.xpose.msra.mxu0 0.0
    %1175 = vmatprep.subr.mxu0 0.0
    %1176 = vmatpush1.xpose.msra.mxu0 0.0
    %1177 = vmatprep.subr.mxu0 0.0
    %1178 = vmatpush1.xpose.msra.mxu0 0.0
    %1179 = vmatprep.subr.mxu0 0.0
    %1180 = vmatpush1.xpose.msra.mxu0 0.0
    %1181 = vmatprep.subr.mxu0 0.0
    %1182 = vmatpush1.xpose.msra.mxu0 0.0
    %1183 = vmatprep.subr.mxu0 0.0
    %1184 = vmatpush1.xpose.msra.mxu0 0.0
    %1185 = vmatprep.subr.mxu0 0.0
    %1186 = vmatpush1.xpose.msra.mxu0 0.0
    %1187 = vmatprep.subr.mxu0 0.0
    %1188 = vmatpush1.xpose.msra.mxu0 0.0
    %1189 = vmatprep.subr.mxu0 0.0
    %1190 = vmatpush1.xpose.msra.mxu0 0.0
    %1191 = vmatprep.subr.mxu0 0.0
    %1192 = vmatpush1.xpose.msra.mxu0 0.0
    %1193 = vmatprep.subr.mxu0 0.0
    %1194 = vmatpush1.xpose.msra.mxu0 0.0
    %1195 = vmatprep.subr.mxu0 0.0
    %1196 = vmatpush1.xpose.msra.mxu0 0.0
    %1197 = vmatprep.subr.mxu0 0.0
    %1198 = vmatpush1.xpose.msra.mxu0 0.0
    %1199 = vmatprep.subr.mxu0 0.0
    %1200 = vmatpush1.xpose.msra.mxu0 0.0
    %1201 = vmatprep.subr.mxu0 0.0
    %1202 = vmatpush1.xpose.msra.mxu0 0.0
    %1203 = vmatprep.subr.mxu0 0.0
    %1204 = vmatpush1.xpose.msra.mxu0 0.0
    %1205 = vmatprep.subr.mxu0 0.0
    %1206 = vmatpush1.xpose.msra.mxu0 0.0
    %1207 = vmatprep.subr.mxu0 0.0
    %1208 = vmatpush1.xpose.msra.mxu0 0.0
    %1209 = vmatprep.subr.mxu0 0.0
    %1210 = vmatpush1.xpose.msra.mxu0 0.0
    %1211 = vmatprep.subr.mxu0 0.0
    %1212 = vmatpush1.xpose.msra.mxu0 0.0
    %1213 = vmatprep.subr.mxu0 0.0
    %1214 = vmatpush1.xpose.msra.mxu0 0.0
    %1215 = vmatprep.subr.mxu0 0.0
    %1216 = vmatpush1.xpose.msra.mxu0 0.0
    %1217 = vmatprep.subr.mxu0 0.0
    %1218 = vmatpush1.xpose.msra.mxu0 0.0
    %1219 = vmatprep.subr.mxu0 0.0
    %1220 = vmatpush1.xpose.msra.mxu0 0.0
    %1221 = vmatprep.subr.mxu0 0.0
    %1222 = vmatpush1.xpose.msra.mxu0 0.0
    %1223 = vmatprep.mubr.f32.mxu0 0.0
    %1224 = vmatmul.mubr.f32.gmra.mrb[0].mxu0 %v1155
    %v1225 = vpop.f32.mrb[0].mxu0
    %v1226 = vadd.f32 0.0, %v1225
    %v1227 = vpop.f32.mrb[0].mxu0
    %1228 = vdwg.mxu0
    %v1229 = vsel %vm240, %v1226, -inf
    %1230 = vmax.xlane.f32.xlu0 %v1229
    %v1231 = vpop.xlane.xlu0 %1230
    %v1232 = vsub.f32 %v1226, %v1231
    %v1233 = vmul.f32 %v1232, 1.442695
    %v1234 = vpow.pop %v1233
    %v1235 = vsel %vm240, %v1234, 0.0
    %1236 = vadd.xlane.f32.xlu0 %v1235
    %v1237 = vpop.xlane.xlu0 %1236
    %v1238 = vrcp.pop %v1237
    %v1239 = vmul.f32 %v1234, %v1238
    %1240 = vrot.lane.b32.xlu0 %v158, 96
    %v1241 = vpop.permute.xlu0 %1240
    %v1244 = vsel %vm240, %v1239, 0
    %1246 = vmatprep.subr.mxu0 0.0
    %1247 = vmatpush1.msra.mxu0 %v1241
    %1248 = vmatprep.subr.mxu0 0.0
    %1249 = vmatpush1.msra.mxu0 0.0
    %1250 = vmatprep.subr.mxu0 0.0
    %1251 = vmatpush1.msra.mxu0 0.0
    %1252 = vmatprep.subr.mxu0 0.0
    %1253 = vmatpush1.msra.mxu0 0.0
    %1254 = vmatprep.subr.mxu0 0.0
    %1255 = vmatpush1.msra.mxu0 0.0
    %1256 = vmatprep.subr.mxu0 0.0
    %1257 = vmatpush1.msra.mxu0 0.0
    %1258 = vmatprep.subr.mxu0 0.0
    %1259 = vmatpush1.msra.mxu0 0.0
    %1260 = vmatprep.subr.mxu0 0.0
    %1261 = vmatpush1.msra.mxu0 0.0
    %1262 = vmatprep.subr.mxu0 0.0
    %1263 = vmatpush1.msra.mxu0 0.0
    %1264 = vmatprep.subr.mxu0 0.0
    %1265 = vmatpush1.msra.mxu0 0.0
    %1266 = vmatprep.subr.mxu0 0.0
    %1267 = vmatpush1.msra.mxu0 0.0
    %1268 = vmatprep.subr.mxu0 0.0
    %1269 = vmatpush1.msra.mxu0 0.0
    %1270 = vmatprep.subr.mxu0 0.0
    %1271 = vmatpush1.msra.mxu0 0.0
    %1272 = vmatprep.subr.mxu0 0.0
    %1273 = vmatpush1.msra.mxu0 0.0
    %1274 = vmatprep.subr.mxu0 0.0
    %1275 = vmatpush1.msra.mxu0 0.0
    %1276 = vmatprep.subr.mxu0 0.0
    %1277 = vmatpush1.msra.mxu0 0.0
    %1278 = vmatprep.subr.mxu0 0.0
    %1279 = vmatpush1.msra.mxu0 0.0
    %1280 = vmatprep.subr.mxu0 0.0
    %1281 = vmatpush1.msra.mxu0 0.0
    %1282 = vmatprep.subr.mxu0 0.0
    %1283 = vmatpush1.msra.mxu0 0.0
    %1284 = vmatprep.subr.mxu0 0.0
    %1285 = vmatpush1.msra.mxu0 0.0
    %1286 = vmatprep.subr.mxu0 0.0
    %1287 = vmatpush1.msra.mxu0 0.0
    %1288 = vmatprep.subr.mxu0 0.0
    %1289 = vmatpush1.msra.mxu0 0.0
    %1290 = vmatprep.subr.mxu0 0.0
    %1291 = vmatpush1.msra.mxu0 0.0
    %1292 = vmatprep.subr.mxu0 0.0
    %1293 = vmatpush1.msra.mxu0 0.0
    %1294 = vmatprep.subr.mxu0 0.0
    %1295 = vmatpush1.msra.mxu0 0.0
    %1296 = vmatprep.subr.mxu0 0.0
    %1297 = vmatpush1.msra.mxu0 0.0
    %1298 = vmatprep.subr.mxu0 0.0
    %1299 = vmatpush1.msra.mxu0 0.0
    %1300 = vmatprep.subr.mxu0 0.0
    %1301 = vmatpush1.msra.mxu0 0.0
    %1302 = vmatprep.subr.mxu0 0.0
    %1303 = vmatpush1.msra.mxu0 0.0
    %1304 = vmatprep.subr.mxu0 0.0
    %1305 = vmatpush1.msra.mxu0 0.0
    %1306 = vmatprep.subr.mxu0 0.0
    %1307 = vmatpush1.msra.mxu0 0.0
    %1308 = vmatprep.subr.mxu0 0.0
    %1309 = vmatpush1.msra.mxu0 0.0
    %1310 = vmatprep.mubr.f32.mxu0 0.0
    %1311 = vmatmul.mubr.f32.gmra.mrb[0].mxu0 %v1244
    %v1312 = vpop.f32.mrb[0].mxu0
    %v1313 = vadd.f32 0.0, %v1312
    %v1314 = vpop.f32.mrb[0].mxu0
    %1315 = vdwg.mxu0
    %v1316 = vld [vmem:[%s4 + $0x20] sm:$0xff]
    %v1317 = vld [vmem:[%s4 + $0x28] sm:$0xff]
    %v1319 = vsel %vm164, %v1148, 0
    %v1322 = vsel %vm164, %v1313, 0
    %1324 = vmatprep.subr.mxu0 0.0
    %1325 = vmatpush1.msra.mxu0 %v1316
    %1326 = vmatprep.subr.mxu0 0.0
    %1327 = vmatpush1.msra.mxu0 %v1317
    %1328 = vmatprep.subr.mxu0 0.0
    %1329 = vmatpush1.msra.mxu0 0.0
    %1330 = vmatprep.subr.mxu0 0.0
    %1331 = vmatpush1.msra.mxu0 0.0
    %1332 = vmatprep.subr.mxu0 0.0
    %1333 = vmatpush1.msra.mxu0 0.0
    %1334 = vmatprep.subr.mxu0 0.0
    %1335 = vmatpush1.msra.mxu0 0.0
    %1336 = vmatprep.subr.mxu0 0.0
    %1337 = vmatpush1.msra.mxu0 0.0
    %1338 = vmatprep.subr.mxu0 0.0
    %1339 = vmatpush1.msra.mxu0 0.0
    %1340 = vmatprep.subr.mxu0 0.0
    %1341 = vmatpush1.msra.mxu0 0.0
    %1342 = vmatprep.subr.mxu0 0.0
    %1343 = vmatpush1.msra.mxu0 0.0
    %1344 = vmatprep.subr.mxu0 0.0
    %1345 = vmatpush1.msra.mxu0 0.0
    %1346 = vmatprep.subr.mxu0 0.0
    %1347 = vmatpush1.msra.mxu0 0.0
    %1348 = vmatprep.subr.mxu0 0.0
    %1349 = vmatpush1.msra.mxu0 0.0
    %1350 = vmatprep.subr.mxu0 0.0
    %1351 = vmatpush1.msra.mxu0 0.0
    %1352 = vmatprep.subr.mxu0 0.0
    %1353 = vmatpush1.msra.mxu0 0.0
    %1354 = vmatprep.subr.mxu0 0.0
    %1355 = vmatpush1.msra.mxu0 0.0
    %1356 = vmatprep.subr.mxu0 0.0
    %1357 = vmatpush1.msra.mxu0 0.0
    %1358 = vmatprep.subr.mxu0 0.0
    %1359 = vmatpush1.msra.mxu0 0.0
    %1360 = vmatprep.subr.mxu0 0.0
    %1361 = vmatpush1.msra.mxu0 0.0
    %1362 = vmatprep.subr.mxu0 0.0
    %1363 = vmatpush1.msra.mxu0 0.0
    %1364 = vmatprep.subr.mxu0 0.0
    %1365 = vmatpush1.msra.mxu0 0.0
    %1366 = vmatprep.subr.mxu0 0.0
    %1367 = vmatpush1.msra.mxu0 0.0
    %1368 = vmatprep.subr.mxu0 0.0
    %1369 = vmatpush1.msra.mxu0 0.0
    %1370 = vmatprep.subr.mxu0 0.0
    %1371 = vmatpush1.msra.mxu0 0.0
    %1372 = vmatprep.subr.mxu0 0.0
    %1373 = vmatpush1.msra.mxu0 0.0
    %1374 = vmatprep.subr.mxu0 0.0
    %1375 = vmatpush1.msra.mxu0 0.0
    %1376 = vmatprep.subr.mxu0 0.0
    %1377 = vmatpush1.msra.mxu0 0.0
    %1378 = vmatprep.subr.mxu0 0.0
    %1379 = vmatpush1.msra.mxu0 0.0
    %1380 = vmatprep.subr.mxu0 0.0
    %1381 = vmatpush1.msra.mxu0 0.0
    %1382 = vmatprep.subr.mxu0 0.0
    %1383 = vmatpush1.msra.mxu0 0.0
    %1384 = vmatprep.subr.mxu0 0.0
    %1385 = vmatpush1.msra.mxu0 0.0
    %1386 = vmatprep.subr.mxu0 0.0
    %1387 = vmatpush1.msra.mxu0 0.0
    %1388 = vmatprep.mubr.f32.mxu0 0.0
    %1389 = vmatmul.mubr.f32.gmra.mrb[0].mxu0 %v1319
    %v1390 = vpop.f32.mrb[0].mxu0
    %v1391 = vadd.f32 0.0, %v1390
    %v1392 = vpop.f32.mrb[0].mxu0
    %1393 = vmatprep.mubr.f32.mxu0 0.0
    %1394 = vmatmul.mubr.f32.gmra.mrb[0].mxu0 %v1322
    %v1395 = vpop.f32.mrb[0].mxu0
    %v1396 = vadd.f32 0.0, %v1395
    %v1397 = vpop.f32.mrb[0].mxu0
    %1398 = vdwg.mxu0
    %v1399 = vadd.f32 %v978, %v1391
    %v1400 = vadd.f32 %v983, %v1396
    %1401 = vrot.lane.b32.xlu0 %v160, 80
    %v1402 = vpop.permute.xlu0 %1401
    %1403 = vrot.lane.b32.xlu0 %v150, 16
    %v1404 = vpop.permute.xlu0 %1403
    %v1405 = vsel %vm164, %v1402, 0
    %v1407 = vsel %vm164, %v1404, 0
    %1409 = vmatprep.subr.mxu0 0.0
    %1410 = vmatpush1.xpose.msra.mxu0 %v1407
    %1411 = vmatprep.subr.mxu0 0.0
    %1412 = vmatpush1.xpose.msra.mxu0 0.0
    %1413 = vmatprep.subr.mxu0 0.0
    %1414 = vmatpush1.xpose.msra.mxu0 0.0
    %1415 = vmatprep.subr.mxu0 0.0
    %1416 = vmatpush1.xpose.msra.mxu0 0.0
    %1417 = vmatprep.subr.mxu0 0.0
    %1418 = vmatpush1.xpose.msra.mxu0 0.0
    %1419 = vmatprep.subr.mxu0 0.0
    %1420 = vmatpush1.xpose.msra.mxu0 0.0
    %1421 = vmatprep.subr.mxu0 0.0
    %1422 = vmatpush1.xpose.msra.mxu0 0.0
    %1423 = vmatprep.subr.mxu0 0.0
    %1424 = vmatpush1.xpose.msra.mxu0 0.0
    %1425 = vmatprep.subr.mxu0 0.0
    %1426 = vmatpush1.xpose.msra.mxu0 0.0
    %1427 = vmatprep.subr.mxu0 0.0
    %1428 = vmatpush1.xpose.msra.mxu0 0.0
    %1429 = vmatprep.subr.mxu0 0.0
    %1430 = vmatpush1.xpose.msra.mxu0 0.0
    %1431 = vmatprep.subr.mxu0 0.0
    %1432 = vmatpush1.xpose.msra.mxu0 0.0
    %1433 = vmatprep.subr.mxu0 0.0
    %1434 = vmatpush1.xpose.msra.mxu0 0.0
    %1435 = vmatprep.subr.mxu0 0.0
    %1436 = vmatpush1.xpose.msra.mxu0 0.0
    %1437 = vmatprep.subr.mxu0 0.0
    %1438 = vmatpush1.xpose.msra.mxu0 0.0
    %1439 = vmatprep.subr.mxu0 0.0
    %1440 = vmatpush1.xpose.msra.mxu0 0.0
    %1441 = vmatprep.subr.mxu0 0.0
    %1442 = vmatpush1.xpose.msra.mxu0 0.0
    %1443 = vmatprep.subr.mxu0 0.0
    %1444 = vmatpush1.xpose.msra.mxu0 0.0
    %1445 = vmatprep.subr.mxu0 0.0
    %1446 = vmatpush1.xpose.msra.mxu0 0.0
    %1447 = vmatprep.subr.mxu0 0.0
    %1448 = vmatpush1.xpose.msra.mxu0 0.0
    %1449 = vmatprep.subr.mxu0 0.0
    %1450 = vmatpush1.xpose.msra.mxu0 0.0
    %1451 = vmatprep.subr.mxu0 0.0
    %1452 = vmatpush1.xpose.msra.mxu0 0.0
    %1453 = vmatprep.subr.mxu0 0.0
    %1454 = vmatpush1.xpose.msra.mxu0 0.0
    %1455 = vmatprep.subr.mxu0 0.0
    %1456 = vmatpush1.xpose.msra.mxu0 0.0
    %1457 = vmatprep.subr.mxu0 0.0
    %1458 = vmatpush1.xpose.msra.mxu0 0.0
    %1459 = vmatprep.subr.mxu0 0.0
    %1460 = vmatpush1.xpose.msra.mxu0 0.0
    %1461 = vmatprep.subr.mxu0 0.0
    %1462 = vmatpush1.xpose.msra.mxu0 0.0
    %1463 = vmatprep.subr.mxu0 0.0
    %1464 = vmatpush1.xpose.msra.mxu0 0.0
    %1465 = vmatprep.subr.mxu0 0.0
    %1466 = vmatpush1.xpose.msra.mxu0 0.0
    %1467 = vmatprep.subr.mxu0 0.0
    %1468 = vmatpush1.xpose.msra.mxu0 0.0
    %1469 = vmatprep.subr.mxu0 0.0
    %1470 = vmatpush1.xpose.msra.mxu0 0.0
    %1471 = vmatprep.subr.mxu0 0.0
    %1472 = vmatpush1.xpose.msra.mxu0 0.0
    %1473 = vmatprep.mubr.f32.mxu0 0.0
    %1474 = vmatmul.mubr.f32.gmra.mrb[0].mxu0 %v1405
    %v1475 = vpop.f32.mrb[0].mxu0
    %v1476 = vadd.f32 0.0, %v1475
    %v1477 = vpop.f32.mrb[0].mxu0
    %1478 = vdwg.mxu0
    %v1479 = vsel %vm240, %v1476, -inf
    %1480 = vmax.xlane.f32.xlu0 %v1479
    %v1481 = vpop.xlane.xlu0 %1480
    %v1482 = vsub.f32 %v1476, %v1481
    %v1483 = vmul.f32 %v1482, 1.442695
    %v1484 = vpow.pop %v1483
    %v1485 = vsel %vm240, %v1484, 0.0
    %1486 = vadd.xlane.f32.xlu0 %v1485
    %v1487 = vpop.xlane.xlu0 %1486
    %v1488 = vrcp.pop %v1487
    %v1489 = vmul.f32 %v1484, %v1488
    %1490 = vrot.lane.b32.xlu0 %v152, 80
    %v1491 = vpop.permute.xlu0 %1490
    %v1494 = vsel %vm240, %v1489, 0
    %1496 = vmatprep.subr.mxu0 0.0
    %1497 = vmatpush1.msra.mxu0 %v1491
    %1498 = vmatprep.subr.mxu0 0.0
    %1499 = vmatpush1.msra.mxu0 0.0
    %1500 = vmatprep.subr.mxu0 0.0
    %1501 = vmatpush1.msra.mxu0 0.0
    %1502 = vmatprep.subr.mxu0 0.0
    %1503 = vmatpush1.msra.mxu0 0.0
    %1504 = vmatprep.subr.mxu0 0.0
    %1505 = vmatpush1.msra.mxu0 0.0
    %1506 = vmatprep.subr.mxu0 0.0
    %1507 = vmatpush1.msra.mxu0 0.0
    %1508 = vmatprep.subr.mxu0 0.0
    %1509 = vmatpush1.msra.mxu0 0.0
    %1510 = vmatprep.subr.mxu0 0.0
    %1511 = vmatpush1.msra.mxu0 0.0
    %1512 = vmatprep.subr.mxu0 0.0
    %1513 = vmatpush1.msra.mxu0 0.0
    %1514 = vmatprep.subr.mxu0 0.0
    %1515 = vmatpush1.msra.mxu0 0.0
    %1516 = vmatprep.subr.mxu0 0.0
    %1517 = vmatpush1.msra.mxu0 0.0
    %1518 = vmatprep.subr.mxu0 0.0
    %1519 = vmatpush1.msra.mxu0 0.0
    %1520 = vmatprep.subr.mxu0 0.0
    %1521 = vmatpush1.msra.mxu0 0.0
    %1522 = vmatprep.subr.mxu0 0.0
    %1523 = vmatpush1.msra.mxu0 0.0
    %1524 = vmatprep.subr.mxu0 0.0
    %1525 = vmatpush1.msra.mxu0 0.0
    %1526 = vmatprep.subr.mxu0 0.0
    %1527 = vmatpush1.msra.mxu0 0.0
    %1528 = vmatprep.subr.mxu0 0.0
    %1529 = vmatpush1.msra.mxu0 0.0
    %1530 = vmatprep.subr.mxu0 0.0
    %1531 = vmatpush1.msra.mxu0 0.0
    %1532 = vmatprep.subr.mxu0 0.0
    %1533 = vmatpush1.msra.mxu0 0.0
    %1534 = vmatprep.subr.mxu0 0.0
    %1535 = vmatpush1.msra.mxu0 0.0
    %1536 = vmatprep.subr.mxu0 0.0
    %1537 = vmatpush1.msra.mxu0 0.0
    %1538 = vmatprep.subr.mxu0 0.0
    %1539 = vmatpush1.msra.mxu0 0.0
    %1540 = vmatprep.subr.mxu0 0.0
    %1541 = vmatpush1.msra.mxu0 0.0
    %1542 = vmatprep.subr.mxu0 0.0
    %1543 = vmatpush1.msra.mxu0 0.0
    %1544 = vmatprep.subr.mxu0 0.0
    %1545 = vmatpush1.msra.mxu0 0.0
    %1546 = vmatprep.subr.mxu0 0.0
    %1547 = vmatpush1.msra.mxu0 0.0
    %1548 = vmatprep.subr.mxu0 0.0
    %1549 = vmatpush1.msra.mxu0 0.0
    %1550 = vmatprep.subr.mxu0 0.0
    %1551 = vmatpush1.msra.mxu0 0.0
    %1552 = vmatprep.subr.mxu0 0.0
    %1553 = vmatpush1.msra.mxu0 0.0
    %1554 = vmatprep.subr.mxu0 0.0
    %1555 = vmatpush1.msra.mxu0 0.0
    %1556 = vmatprep.subr.mxu0 0.0
    %1557 = vmatpush1.msra.mxu0 0.0
    %1558 = vmatprep.subr.mxu0 0.0
    %1559 = vmatpush1.msra.mxu0 0.0
    %1560 = vmatprep.mubr.f32.mxu0 0.0
    %1561 = vmatmul.mubr.f32.gmra.mrb[0].mxu0 %v1494
    %v1562 = vpop.f32.mrb[0].mxu0
    %v1563 = vadd.f32 0.0, %v1562
    %v1564 = vpop.f32.mrb[0].mxu0
    %1565 = vdwg.mxu0
    %1566 = vrot.lane.b32.xlu0 %v325, 80
    %v1567 = vpop.permute.xlu0 %1566
    %1568 = vrot.lane.b32.xlu0 %v156, 16
    %v1569 = vpop.permute.xlu0 %1568
    %v1570 = vsel %vm164, %v1567, 0
    %v1572 = vsel %vm164, %v1569, 0
    %1574 = vmatprep.subr.mxu0 0.0
    %1575 = vmatpush1.xpose.msra.mxu0 %v1572
    %1576 = vmatprep.subr.mxu0 0.0
    %1577 = vmatpush1.xpose.msra.mxu0 0.0
    %1578 = vmatprep.subr.mxu0 0.0
    %1579 = vmatpush1.xpose.msra.mxu0 0.0
    %1580 = vmatprep.subr.mxu0 0.0
    %1581 = vmatpush1.xpose.msra.mxu0 0.0
    %1582 = vmatprep.subr.mxu0 0.0
    %1583 = vmatpush1.xpose.msra.mxu0 0.0
    %1584 = vmatprep.subr.mxu0 0.0
    %1585 = vmatpush1.xpose.msra.mxu0 0.0
    %1586 = vmatprep.subr.mxu0 0.0
    %1587 = vmatpush1.xpose.msra.mxu0 0.0
    %1588 = vmatprep.subr.mxu0 0.0
    %1589 = vmatpush1.xpose.msra.mxu0 0.0
    %1590 = vmatprep.subr.mxu0 0.0
    %1591 = vmatpush1.xpose.msra.mxu0 0.0
    %1592 = vmatprep.subr.mxu0 0.0
    %1593 = vmatpush1.xpose.msra.mxu0 0.0
    %1594 = vmatprep.subr.mxu0 0.0
    %1595 = vmatpush1.xpose.msra.mxu0 0.0
    %1596 = vmatprep.subr.mxu0 0.0
    %1597 = vmatpush1.xpose.msra.mxu0 0.0
    %1598 = vmatprep.subr.mxu0 0.0
    %1599 = vmatpush1.xpose.msra.mxu0 0.0
    %1600 = vmatprep.subr.mxu0 0.0
    %1601 = vmatpush1.xpose.msra.mxu0 0.0
    %1602 = vmatprep.subr.mxu0 0.0
    %1603 = vmatpush1.xpose.msra.mxu0 0.0
    %1604 = vmatprep.subr.mxu0 0.0
    %1605 = vmatpush1.xpose.msra.mxu0 0.0
    %1606 = vmatprep.subr.mxu0 0.0
    %1607 = vmatpush1.xpose.msra.mxu0 0.0
    %1608 = vmatprep.subr.mxu0 0.0
    %1609 = vmatpush1.xpose.msra.mxu0 0.0
    %1610 = vmatprep.subr.mxu0 0.0
    %1611 = vmatpush1.xpose.msra.mxu0 0.0
    %1612 = vmatprep.subr.mxu0 0.0
    %1613 = vmatpush1.xpose.msra.mxu0 0.0
    %1614 = vmatprep.subr.mxu0 0.0
    %1615 = vmatpush1.xpose.msra.mxu0 0.0
    %1616 = vmatprep.subr.mxu0 0.0
    %1617 = vmatpush1.xpose.msra.mxu0 0.0
    %1618 = vmatprep.subr.mxu0 0.0
    %1619 = vmatpush1.xpose.msra.mxu0 0.0
    %1620 = vmatprep.subr.mxu0 0.0
    %1621 = vmatpush1.xpose.msra.mxu0 0.0
    %1622 = vmatprep.subr.mxu0 0.0
    %1623 = vmatpush1.xpose.msra.mxu0 0.0
    %1624 = vmatprep.subr.mxu0 0.0
    %1625 = vmatpush1.xpose.msra.mxu0 0.0
    %1626 = vmatprep.subr.mxu0 0.0
    %1627 = vmatpush1.xpose.msra.mxu0 0.0
    %1628 = vmatprep.subr.mxu0 0.0
    %1629 = vmatpush1.xpose.msra.mxu0 0.0
    %1630 = vmatprep.subr.mxu0 0.0
    %1631 = vmatpush1.xpose.msra.mxu0 0.0
    %1632 = vmatprep.subr.mxu0 0.0
    %1633 = vmatpush1.xpose.msra.mxu0 0.0
    %1634 = vmatprep.subr.mxu0 0.0
    %1635 = vmatpush1.xpose.msra.mxu0 0.0
    %1636 = vmatprep.subr.mxu0 0.0
    %1637 = vmatpush1.xpose.msra.mxu0 0.0
    %1638 = vmatprep.mubr.f32.mxu0 0.0
    %1639 = vmatmul.mubr.f32.gmra.mrb[0].mxu0 %v1570
    %v1640 = vpop.f32.mrb[0].mxu0
    %v1641 = vadd.f32 0.0, %v1640
    %v1642 = vpop.f32.mrb[0].mxu0
    %1643 = vdwg.mxu0
    %v1644 = vsel %vm240, %v1641, -inf
    %1645 = vmax.xlane.f32.xlu0 %v1644
    %v1646 = vpop.xlane.xlu0 %1645
    %v1647 = vsub.f32 %v1641, %v1646
    %v1648 = vmul.f32 %v1647, 1.442695
    %v1649 = vpow.pop %v1648
    %v1650 = vsel %vm240, %v1649, 0.0
    %1651 = vadd.xlane.f32.xlu0 %v1650
    %v1652 = vpop.xlane.xlu0 %1651
    %v1653 = vrcp.pop %v1652
    %v1654 = vmul.f32 %v1649, %v1653
    %1655 = vrot.lane.b32.xlu0 %v158, 80
    %v1656 = vpop.permute.xlu0 %1655
    %v1659 = vsel %vm240, %v1654, 0
    %1661 = vmatprep.subr.mxu0 0.0
    %1662 = vmatpush1.msra.mxu0 %v1656
    %1663 = vmatprep.subr.mxu0 0.0
    %1664 = vmatpush1.msra.mxu0 0.0
    %1665 = vmatprep.subr.mxu0 0.0
    %1666 = vmatpush1.msra.mxu0 0.0
    %1667 = vmatprep.subr.mxu0 0.0
    %1668 = vmatpush1.msra.mxu0 0.0
    %1669 = vmatprep.subr.mxu0 0.0
    %1670 = vmatpush1.msra.mxu0 0.0
    %1671 = vmatprep.subr.mxu0 0.0
    %1672 = vmatpush1.msra.mxu0 0.0
    %1673 = vmatprep.subr.mxu0 0.0
    %1674 = vmatpush1.msra.mxu0 0.0
    %1675 = vmatprep.subr.mxu0 0.0
    %1676 = vmatpush1.msra.mxu0 0.0
    %1677 = vmatprep.subr.mxu0 0.0
    %1678 = vmatpush1.msra.mxu0 0.0
    %1679 = vmatprep.subr.mxu0 0.0
    %1680 = vmatpush1.msra.mxu0 0.0
    %1681 = vmatprep.subr.mxu0 0.0
    %1682 = vmatpush1.msra.mxu0 0.0
    %1683 = vmatprep.subr.mxu0 0.0
    %1684 = vmatpush1.msra.mxu0 0.0
    %1685 = vmatprep.subr.mxu0 0.0
    %1686 = vmatpush1.msra.mxu0 0.0
    %1687 = vmatprep.subr.mxu0 0.0
    %1688 = vmatpush1.msra.mxu0 0.0
    %1689 = vmatprep.subr.mxu0 0.0
    %1690 = vmatpush1.msra.mxu0 0.0
    %1691 = vmatprep.subr.mxu0 0.0
    %1692 = vmatpush1.msra.mxu0 0.0
    %1693 = vmatprep.subr.mxu0 0.0
    %1694 = vmatpush1.msra.mxu0 0.0
    %1695 = vmatprep.subr.mxu0 0.0
    %1696 = vmatpush1.msra.mxu0 0.0
    %1697 = vmatprep.subr.mxu0 0.0
    %1698 = vmatpush1.msra.mxu0 0.0
    %1699 = vmatprep.subr.mxu0 0.0
    %1700 = vmatpush1.msra.mxu0 0.0
    %1701 = vmatprep.subr.mxu0 0.0
    %1702 = vmatpush1.msra.mxu0 0.0
    %1703 = vmatprep.subr.mxu0 0.0
    %1704 = vmatpush1.msra.mxu0 0.0
    %1705 = vmatprep.subr.mxu0 0.0
    %1706 = vmatpush1.msra.mxu0 0.0
    %1707 = vmatprep.subr.mxu0 0.0
    %1708 = vmatpush1.msra.mxu0 0.0
    %1709 = vmatprep.subr.mxu0 0.0
    %1710 = vmatpush1.msra.mxu0 0.0
    %1711 = vmatprep.subr.mxu0 0.0
    %1712 = vmatpush1.msra.mxu0 0.0
    %1713 = vmatprep.subr.mxu0 0.0
    %1714 = vmatpush1.msra.mxu0 0.0
    %1715 = vmatprep.subr.mxu0 0.0
    %1716 = vmatpush1.msra.mxu0 0.0
    %1717 = vmatprep.subr.mxu0 0.0
    %1718 = vmatpush1.msra.mxu0 0.0
    %1719 = vmatprep.subr.mxu0 0.0
    %1720 = vmatpush1.msra.mxu0 0.0
    %1721 = vmatprep.subr.mxu0 0.0
    %1722 = vmatpush1.msra.mxu0 0.0
    %1723 = vmatprep.subr.mxu0 0.0
    %1724 = vmatpush1.msra.mxu0 0.0
    %1725 = vmatprep.mubr.f32.mxu0 0.0
    %1726 = vmatmul.mubr.f32.gmra.mrb[0].mxu0 %v1659
    %v1727 = vpop.f32.mrb[0].mxu0
    %v1728 = vadd.f32 0.0, %v1727
    %v1729 = vpop.f32.mrb[0].mxu0
    %1730 = vdwg.mxu0
    %v1731 = vld [vmem:[%s4 + $0x30] sm:$0xff]
    %v1732 = vld [vmem:[%s4 + $0x38] sm:$0xff]
    %v1734 = vsel %vm164, %v1563, 0
    %v1737 = vsel %vm164, %v1728, 0
    %1739 = vmatprep.subr.mxu0 0.0
    %1740 = vmatpush1.msra.mxu0 %v1731
    %1741 = vmatprep.subr.mxu0 0.0
    %1742 = vmatpush1.msra.mxu0 %v1732
    %1743 = vmatprep.subr.mxu0 0.0
    %1744 = vmatpush1.msra.mxu0 0.0
    %1745 = vmatprep.subr.mxu0 0.0
    %1746 = vmatpush1.msra.mxu0 0.0
    %1747 = vmatprep.subr.mxu0 0.0
    %1748 = vmatpush1.msra.mxu0 0.0
    %1749 = vmatprep.subr.mxu0 0.0
    %1750 = vmatpush1.msra.mxu0 0.0
    %1751 = vmatprep.subr.mxu0 0.0
    %1752 = vmatpush1.msra.mxu0 0.0
    %1753 = vmatprep.subr.mxu0 0.0
    %1754 = vmatpush1.msra.mxu0 0.0
    %1755 = vmatprep.subr.mxu0 0.0
    %1756 = vmatpush1.msra.mxu0 0.0
    %1757 = vmatprep.subr.mxu0 0.0
    %1758 = vmatpush1.msra.mxu0 0.0
    %1759 = vmatprep.subr.mxu0 0.0
    %1760 = vmatpush1.msra.mxu0 0.0
    %1761 = vmatprep.subr.mxu0 0.0
    %1762 = vmatpush1.msra.mxu0 0.0
    %1763 = vmatprep.subr.mxu0 0.0
    %1764 = vmatpush1.msra.mxu0 0.0
    %1765 = vmatprep.subr.mxu0 0.0
    %1766 = vmatpush1.msra.mxu0 0.0
    %1767 = vmatprep.subr.mxu0 0.0
    %1768 = vmatpush1.msra.mxu0 0.0
    %1769 = vmatprep.subr.mxu0 0.0
    %1770 = vmatpush1.msra.mxu0 0.0
    %1771 = vmatprep.subr.mxu0 0.0
    %1772 = vmatpush1.msra.mxu0 0.0
    %1773 = vmatprep.subr.mxu0 0.0
    %1774 = vmatpush1.msra.mxu0 0.0
    %1775 = vmatprep.subr.mxu0 0.0
    %1776 = vmatpush1.msra.mxu0 0.0
    %1777 = vmatprep.subr.mxu0 0.0
    %1778 = vmatpush1.msra.mxu0 0.0
    %1779 = vmatprep.subr.mxu0 0.0
    %1780 = vmatpush1.msra.mxu0 0.0
    %1781 = vmatprep.subr.mxu0 0.0
    %1782 = vmatpush1.msra.mxu0 0.0
    %1783 = vmatprep.subr.mxu0 0.0
    %1784 = vmatpush1.msra.mxu0 0.0
    %1785 = vmatprep.subr.mxu0 0.0
    %1786 = vmatpush1.msra.mxu0 0.0
    %1787 = vmatprep.subr.mxu0 0.0
    %1788 = vmatpush1.msra.mxu0 0.0
    %1789 = vmatprep.subr.mxu0 0.0
    %1790 = vmatpush1.msra.mxu0 0.0
    %1791 = vmatprep.subr.mxu0 0.0
    %1792 = vmatpush1.msra.mxu0 0.0
    %1793 = vmatprep.subr.mxu0 0.0
    %1794 = vmatpush1.msra.mxu0 0.0
    %1795 = vmatprep.subr.mxu0 0.0
    %1796 = vmatpush1.msra.mxu0 0.0
    %1797 = vmatprep.subr.mxu0 0.0
    %1798 = vmatpush1.msra.mxu0 0.0
    %1799 = vmatprep.subr.mxu0 0.0
    %1800 = vmatpush1.msra.mxu0 0.0
    %1801 = vmatprep.subr.mxu0 0.0
    %1802 = vmatpush1.msra.mxu0 0.0
    %1803 = vmatprep.mubr.f32.mxu0 0.0
    %1804 = vmatmul.mubr.f32.gmra.mrb[0].mxu0 %v1734
    %v1805 = vpop.f32.mrb[0].mxu0
    %v1806 = vadd.f32 0.0, %v1805
    %v1807 = vpop.f32.mrb[0].mxu0
    %1808 = vmatprep.mubr.f32.mxu0 0.0
    %1809 = vmatmul.mubr.f32.gmra.mrb[0].mxu0 %v1737
    %v1810 = vpop.f32.mrb[0].mxu0
    %v1811 = vadd.f32 0.0, %v1810
    %v1812 = vpop.f32.mrb[0].mxu0
    %1813 = vdwg.mxu0
    %v1814 = vadd.f32 %v1399, %v1806
    %v1815 = vadd.f32 %v1400, %v1811
    %1816 = vst.msk [vmem:[#allocation2] sm:$0xff] %vm23, %v1814
    %1817 = vst.msk [vmem:[#allocation2 + $0x8] sm:$0xff] %vm23, %v1815
    // Predicated region
    $region22: #{tpu_custom_call.1} parent=1 // pred_check
      _
    $region23: #{tpu_custom_call.1} parent=1 // pred_check_branch
      %1819 = sbr.rel (0) target = $region25
    $region24: #{tpu_custom_call.1} parent=1 // pred_region
      %s1821 = ssub.s32 256, 256
      %1822 = vsyncadd [#allocation3], %s1821
      %s1823 = sshll.u32 [#allocation2], 4
      %s1824 = int_to_ptr.vmem [resolvable:$true] %s1823
      %1829 = dma.vmem_to_hbm [thread:$0]  %s1824, 256, %s5, [#allocation3], 128, 128, 8
    $region25: #{tpu_custom_call.1} parent=1 // pred_fallthru
      _
    // Predicated region
    $region26: #{tpu_custom_call.1} parent=1 // pred_check
      _
    $region27: #{tpu_custom_call.1} parent=1 // pred_check_branch
      %1831 = sbr.rel (0) target = $region29
    $region28: #{tpu_custom_call.1} parent=1 // pred_region
      %1832 = dma.done [#allocation3], 256
    $region29: #{tpu_custom_call.1} parent=1 // pred_fallthru
      _
    %1833 = vsyncpa [#allocation3], 1

</llo_original>
